<compile_context>
chip_gen: v6e
topology: v6e:2x2x1
jax: 0.10.0
libtpu: 0.0.40
codegen_flags: <defaults>
</compile_context>

<pallas_src>
import functools

import jax
import jax.numpy as jnp
from jax import lax
from jax.experimental import pallas as pl
from jax.experimental.pallas import tpu as pltpu


def _round_up(x, m):
    return -(-x // m) * m


# ----------------------------- Pallas kernel ------------------------------- #
def _conv1d_kernel(x_ref, w_ref, b_ref, o_ref, acc_ref, *,
                   tile_t, n_chunks, rep, blocks, lrelu):
    """Grouped Conv1d as block-diagonal matmuls + optional leaky_relu(0.1).

    x_ref:   (T_rows, W_e)            bf16, stride-deinterleaved (+ optional tap-packed)
    w_ref:   (GB, n_j*d_in, nb_pad)   bf16 weight slabs (one per output block)
    b_ref:   (1, GB*nb_pad)           f32 bias (zero-padded columns)
    o_ref:   (tile_t, GB*nb_pad)      bf16 output tile (lane-dense, 128-aligned blocks)
    acc_ref: (tile_t, nb_pad)         f32 VMEM scratch accumulator
    """
    t = pl.program_id(1)
    base = t * tile_t
    if tile_t % 8 == 0:
        base = pl.multiple_of(base, 8)
    nb_pad = w_ref.shape[-1]

    for gb, (lane_lo, d_in) in enumerate(blocks):
        de = d_in * rep
        out_lo = gb * nb_pad

        def chunk(c, carry, _gb=gb, _lane_lo=lane_lo, _de=de):
            xs = x_ref[pl.ds(base + c * rep, tile_t), _lane_lo:_lane_lo + _de]
            r0 = c * _de
            if _de % 8 == 0:
                r0 = pl.multiple_of(r0, 8)
            ws = w_ref[_gb, pl.ds(r0, _de), :]
            acc_ref[...] += jnp.dot(xs, ws, preferred_element_type=jnp.float32)
            return carry

        acc_ref[...] = jnp.zeros_like(acc_ref)
        if n_chunks == 1:
            chunk(0, 0)
        else:
            lax.fori_loop(0, n_chunks, chunk, 0)

        a = acc_ref[...] + b_ref[0:1, out_lo:out_lo + nb_pad]     # bias in f32
        if lrelu:
            a = jnp.where(a >= 0.0, a, 0.1 * a)                   # f32 epilogue
        o_ref[:, out_lo:out_lo + nb_pad] = a.astype(o_ref.dtype)


# ------------------------------- layer wrapper ------------------------------ #
_SINGLE_BUFFER_OK = [True]   # pl.Buffered(1) for invariant blocks; fallback if rejected


def conv1d_layer(x_blc, layer, *, lrelu):
    """x_blc: (B, T, Cin) -> (B, T_out, Cout) bf16."""
    B, T, Cin = x_blc.shape
    K, s, pad, G = layer['K'], layer['stride'], layer['pad'], layer['groups']
    slabs, bias_p = layer['slabs'], layer['bias_pad']
    blocks, n_j = layer['blocks'], layer['n_j']
    nb_true, nb_pad = layer['nb_true'], layer['nb_pad']
    GB = len(blocks)
    cout_pad = GB * nb_pad
    d_in = blocks[0][1]

    t_out = (T + 2 * pad - K) // s + 1
    if t_out % 8 == 0:
        tile_t = min(256, t_out)
    elif t_out <= 256:
        tile_t = t_out                      # full-extent time block (allowed by Mosaic)
    else:
        tile_t = 256                        # last block partial -> masked writeback
    n_t = -(-t_out // tile_t)

    # Tap packing: narrow layers get wrapper-side im2col (taps -> lanes) so the kernel
    # sees a single aligned, lane-dense chunk; wide layers keep one dot per tap.
    rep = n_j if (GB == 1 and d_in < 128 and n_j * d_in <= 2048) else 1
    n_chunks = -(-n_j // rep)

    T_rows = n_t * tile_t + n_j - 1          # stride-deinterleaved rows needed
    right = T_rows * s - T - pad
    assert right >= 0, "unsupported conv geometry (padding shortfall)"

    xb = x_blc.astype(jnp.bfloat16)
    xp = jnp.pad(xb, ((0, 0), (pad, right), (0, 0)))
    # de-interleave stride phases, group-major lanes: (group, phase, chan-in-group)
    xp = xp.reshape(B, T_rows, s, G, Cin // G)
    xp = jnp.transpose(xp, (0, 1, 3, 2, 4)).reshape(B, T_rows, s * Cin)
    if rep > 1:
        T_rows_x = n_t * tile_t
        xp = jnp.concatenate([xp[:, u:u + T_rows_x, :] for u in range(n_j)], axis=-1)
    else:
        T_rows_x = T_rows
    W_e = xp.shape[-1]

    # explicit VMEM budget: x double-buffered, weights counted twice so the number is
    # still valid for the non-Buffered(1) fallback, + out tiles + bias + f32 scratch.
    def _pad_bytes(r, c, itemsize):
        return _round_up(r, 16) * _round_up(c, 128) * itemsize
    need = (2 * _pad_bytes(T_rows_x, W_e, 2)
            + 2 * GB * _pad_bytes(int(slabs.shape[1]), nb_pad, 2)
            + 2 * _pad_bytes(tile_t, cout_pad, 2)
            + 2 * _pad_bytes(1, cout_pad, 4)
            + _pad_bytes(tile_t, nb_pad, 4))
    vmem_limit = int(max(32 << 20, min(need + (4 << 20), 128 << 20)))

    kernel = functools.partial(_conv1d_kernel, tile_t=tile_t, n_chunks=n_chunks,
                               rep=rep, blocks=blocks, lrelu=lrelu)

    def call(single_buffer_invariants):
        if single_buffer_invariants:
            w_spec = pl.BlockSpec(slabs.shape, lambda b, t: (0, 0, 0),
                                  pipeline_mode=pl.Buffered(1))
            b_spec = pl.BlockSpec(bias_p.shape, lambda b, t: (0, 0),
                                  pipeline_mode=pl.Buffered(1))
        else:
            w_spec = pl.BlockSpec(slabs.shape, lambda b, t: (0, 0, 0))
            b_spec = pl.BlockSpec(bias_p.shape, lambda b, t: (0, 0))
        return pl.pallas_call(
            kernel,
            out_shape=jax.ShapeDtypeStruct((B, t_out, cout_pad), jnp.bfloat16),
            grid=(B, n_t),
            in_specs=[
                pl.BlockSpec((None, T_rows_x, W_e), lambda b, t: (b, 0, 0)),  # resident
                w_spec,
                b_spec,
            ],
            out_specs=pl.BlockSpec((None, tile_t, cout_pad), lambda b, t: (b, t, 0)),
            scratch_shapes=[pltpu.VMEM((tile_t, nb_pad), jnp.float32)],
            compiler_params=pltpu.CompilerParams(
                dimension_semantics=("parallel", "parallel"),
                vmem_limit_bytes=vmem_limit),
        )(xp, slabs, bias_p)

    if _SINGLE_BUFFER_OK[0]:
        try:
            out_pad = call(True)
        except Exception:
            _SINGLE_BUFFER_OK[0] = False
            out_pad = call(False)
    else:
        out_pad = call(False)

    # strip per-block zero-padded output lanes back to the true channel count
    out = out_pad.reshape(B, t_out, GB, nb_pad)[..., :nb_true]
    return out.reshape(B, t_out, GB * nb_true)


# -------------------------- parameter construction ------------------------- #
def spectral_normalize(w, key, n_power_iterations=1, eps=1e-12):
    """Deterministic spectral_norm reparameterization (weight preprocessing).

    TODO(synk): torch.nn.utils.spectral_norm keeps persistent u/v buffers; to match a
    real PyTorch checkpoint, load its u/v instead of this fresh power iteration.
    """
    cout = w.shape[0]
    w2d = w.reshape(cout, -1)
    u = jax.random.normal(key, (cout,), dtype=w.dtype)
    u = u / (jnp.linalg.norm(u) + eps)
    v = jnp.zeros((w2d.shape[1],), w.dtype)
    for _ in range(n_power_iterations):
        v = w2d.T @ u
        v = v / (jnp.linalg.norm(v) + eps)
        u = w2d @ v
        u = u / (jnp.linalg.norm(u) + eps)
    sigma = u @ (w2d @ v)
    return w / sigma


def grouped_to_dense_kio(w_oik, groups):
    """torch Conv1d weight (Cout, Cin/groups, K) -> dense block-diag (K, Cin, Cout)."""
    Cout, Cin_g, K = w_oik.shape
    Cout_g = Cout // groups
    Cin = Cin_g * groups
    dense = jnp.zeros((K, Cin, Cout), w_oik.dtype)
    wg = w_oik.reshape(groups, Cout_g, Cin_g, K)
    for g in range(groups):
        blk = jnp.transpose(wg[g], (2, 1, 0))  # (K, Cin_g, Cout_g)
        dense = dense.at[:, g * Cin_g:(g + 1) * Cin_g,
                         g * Cout_g:(g + 1) * Cout_g].set(blk)
    return dense


def _output_blocks(Cin, Cout, G, stride, target=128):
    """Output-channel blocking aligned to conv groups.

    Returns (nb_true, blocks); blocks = [(lane_lo, d_in)] in the kernel's
    stride-deinterleaved group-major lane coordinates.  Block gb produces the true
    output channels [gb*nb_true, (gb+1)*nb_true).
    TODO(synk): use target=256 on v6e/v7x (2x256x256 MXU) together with tile_t=128.
    """
    Cin_g, Cout_g = Cin // G, Cout // G
    if Cout_g >= target and Cout_g % target == 0:
        # split a (large) group's outputs into target-wide blocks, full-group input each
        return target, [(g * Cin_g * stride, Cin_g * stride)
                        for g in range(G) for _ in range(Cout_g // target)]
    gpb = max(1, min(G, target // max(1, Cout_g)))   # whole groups per output block
    while G % gpb:
        gpb -= 1
    nb_true = gpb * Cout_g
    blocks = [(gb * gpb * Cin_g * stride, gpb * Cin_g * stride)
              for gb in range(G // gpb)]
    return nb_true, blocks


def build_weight_slabs(dense_kio, G, stride, blocks, nb_true, nb_pad):
    """(K, Cin, Cout) -> (GB, n_j*d_in, nb_pad) bf16 slabs; rows ordered
    (tap, group, phase, channel) to match the kernel's input lane order."""
    K, Cin, Cout = dense_kio.shape
    Cin_g = Cin // G
    n_j = -(-K // stride)
    w = jnp.pad(dense_kio, ((0, n_j * stride - K), (0, 0), (0, 0)))  # zero taps
    slabs = []
    for gb, (lane_lo, d_in) in enumerate(blocks):
        in_lo = lane_lo // stride
        in_w = d_in // stride
        out_lo = gb * nb_true
        blk = w[:, in_lo:in_lo + in_w, out_lo:out_lo + nb_true]       # (n_j*s, in_w, nb)
        blk = blk.reshape(n_j, stride, in_w // Cin_g, Cin_g, nb_true)  # (j, r, g, c, nb)
        blk = jnp.transpose(blk, (0, 2, 1, 3, 4))                      # (j, g, r, c, nb)
        blk = blk.reshape(n_j * d_in, nb_true)
        slabs.append(jnp.pad(blk, ((0, 0), (0, nb_pad - nb_true))))    # lane-dense cols
    return jnp.stack(slabs).astype(jnp.bfloat16)


def make_disc_params(key, factor):
    c64, c128, c256, c512 = (int(64 * factor), int(128 * factor),
                             int(256 * factor), int(512 * factor))
    cfgs = [
        # (Cin, Cout, K, stride, groups, pad)
        (1,    c64,  15, 1, 1,  7),
        (c64,  c64,  41, 2, 4,  20),
        (c64,  c128, 41, 2, 16, 20),
        (c128, c256, 41, 4, 16, 20),
        (c256, c512, 41, 4, 16, 20),
        (c512, c512, 41, 1, 16, 20),
        (c512, c512, 5,  1, 1,  2),
        (c512, 1,    3,  1, 1,  1),     # conv_post
    ]
    layers = []
    for (cin, cout, k, s, g, p) in cfgs:
        key, kw, kb, ku = jax.random.split(key, 4)
        fan_in = (cin // g) * k
        w = jax.random.normal(kw, (cout, cin // g, k), jnp.float32) / jnp.sqrt(fan_in)
        b = jax.random.normal(kb, (cout,), jnp.float32) * 0.01
        w = spectral_normalize(w, ku)                     # use_spectral_norm=True
        dense = grouped_to_dense_kio(w, g)                # f32 (reference only)
        nb_true, blocks = _output_blocks(cin, cout, g, s)
        nb_pad = _round_up(nb_true, 128)
        n_j = -(-k // s)
        slabs = build_weight_slabs(dense, g, s, blocks, nb_true, nb_pad)
        gbn = len(blocks)
        bias_pad = jnp.pad(b.reshape(gbn, nb_true),
                           ((0, 0), (0, nb_pad - nb_true))).reshape(1, gbn * nb_pad)
        layers.append(dict(K=k, stride=s, pad=p, groups=g, n_j=n_j,
                           nb_true=nb_true, nb_pad=nb_pad, blocks=tuple(blocks),
                           slabs=slabs, bias_pad=bias_pad.astype(jnp.float32),
                           bias=b, dense=dense))
    return {'convs': layers[:-1], 'post': layers[-1]}


# ------------------------------ forward passes ------------------------------ #
def discriminator_forward(x_ncl, params):
    """DiscriminatorSPlusPlus.forward with scale=1 (pooling = Identity)."""
    # TODO(synk): mel_cond branch (MultiScaleResnet embed + proj + interpolate) is not
    # implemented; MSDPlusPlus constructs its discriminators with mel_cond=False.
    h = jnp.transpose(x_ncl, (0, 2, 1))                   # (B, 1, T) -> (B, T, 1)
    activations = []
    for layer in params['convs']:
        h = conv1d_layer(h, layer, lrelu=True)
        activations.append(jnp.transpose(h, (0, 2, 1)))   # (B, C, T) like torch
    h = conv1d_layer(h, params['post'], lrelu=False)
    activations.append(jnp.transpose(h, (0, 2, 1)))
    logits = h.reshape(h.shape[0], -1).astype(jnp.float32)   # torch.flatten(x, 1, -1)
    return logits, activations


def msd_plusplus_forward(x_ncl, all_params, mel=None):
    logits, activations = {}, {}
    for name, p in all_params.items():
        lg, act = discriminator_forward(x_ncl, p)
        logits[name] = lg
        activations[name] = act
    return logits, activations


# ------------------------------ pure-JAX reference -------------------------- #
def _conv1d_ref(x_blc, dense_kio, bias, stride, pad):
    out = lax.conv_general_dilated(
        x_blc.astype(jnp.bfloat16), dense_kio.astype(jnp.bfloat16),
        window_strides=(stride,), padding=[(pad, pad)],
        dimension_numbers=('NWC', 'WIO', 'NWC'),
        preferred_element_type=jnp.float32)
    return out + bias.reshape(1, 1, -1)


def _discriminator_ref(x_ncl, params):
    """Mirrors the kernel's bf16 layer-boundary casts with f32 accumulation."""
    h = jnp.transpose(x_ncl, (0, 2, 1))
    acts = []
    for layer in params['convs']:
        o = _conv1d_ref(h, layer['dense'], layer['bias'], layer['stride'], layer['pad'])
        o = jnp.where(o >= 0.0, o, 0.1 * o)
        h = o.astype(jnp.bfloat16)
        acts.append(h)
    p = params['post']
    o = _conv1d_ref(h, p['dense'], p['bias'], p['stride'], p['pad'])
    h = o.astype(jnp.bfloat16)
    acts.append(h)
    return h.reshape(h.shape[0], -1).astype(jnp.float32), acts


# ----------------------------------- main ----------------------------------- #
if __name__ == "__main__":
    key = jax.random.PRNGKey(0)
    kx, kp = jax.random.split(key)

    B, T = 2, 512
    factor = 0.25      # small channel widths (16..128), valid w.r.t. groups 4/16
    num_discs = 1
    x = jax.random.normal(kx, (B, 1, T), jnp.float32)   # PyTorch NCL layout

    all_params = {}
    for i in range(num_discs):
        kp, kd = jax.random.split(kp)
        all_params[f'k{i + 1}'] = make_disc_params(kd, factor)

    logits, activations = msd_plusplus_forward(x, all_params)
    jax.block_until_ready(logits)
    jax.block_until_ready(activations)

    # self-check against an XLA reference using the same effective (bf16) weights
    ref_logits, ref_acts = _discriminator_ref(x, all_params['k1'])

    def _close(a, b, rel=0.02):
        a = jnp.asarray(a, jnp.float32)
        b = jnp.asarray(b, jnp.float32)
        err = float(jnp.max(jnp.abs(a - b)))
        tol = rel * float(jnp.max(jnp.abs(b))) + 1e-4
        return err <= tol, err, tol

    ok, err, tol = _close(logits['k1'], ref_logits)
    assert ok, f"logits mismatch: {err} > {tol}"
    for i, (a, r) in enumerate(zip(activations['k1'], ref_acts)):
        ok, err, tol = _close(a, jnp.transpose(r, (0, 2, 1)))
        assert ok, f"activation {i} mismatch: {err} > {tol}"

    print("KERNEL_OK")
</pallas_src>

<mosaic_0001>
module attributes {stable_mosaic.version = 11 : i64} {
  func.func @_conv1d_kernel(%arg0: i32, %arg1: i32, %arg2: memref<1x512x15xbf16, #tpu.memory_space<vmem>>, %arg3: memref<1x15x128xbf16, #tpu.memory_space<vmem>>, %arg4: memref<1x128xf32, #tpu.memory_space<vmem>>, %arg5: memref<1x256x128xbf16, #tpu.memory_space<vmem>>, %arg6: memref<256x128xf32, #tpu.memory_space<vmem>>) attributes {dimension_semantics = [#tpu.dimension_semantics<parallel>, #tpu.dimension_semantics<parallel>], iteration_bounds = array<i64: 2, 2>, scalar_prefetch = 0 : i64, scratch_operands = 1 : i64, tpu.core_type = #tpu.core_type<tc>, window_params = [{transform_indices = @transform_0, window_bounds = array<i64: 1, 512, 15>}, {pipeline_mode = #tpu.pipeline_mode<synchronous>, transform_indices = @transform_1, window_bounds = array<i64: 1, 15, 128>}, {pipeline_mode = #tpu.pipeline_mode<synchronous>, transform_indices = @transform_2, window_bounds = array<i64: 1, 128>}, {transform_indices = @transform_3, window_bounds = array<i64: 1, 256, 128>}]} {
    %c256_i32 = arith.constant 256 : i32
    %0 = arith.muli %arg1, %c256_i32 : i32
    %1 = tpu.assume_multiple %0, 8 : i32
    %cst = arith.constant 0.000000e+00 : f32
    %2 = vector.broadcast %cst : f32 to vector<256x128xf32>
    %c0 = arith.constant 0 : index
    %c0_0 = arith.constant 0 : index
    %3 = vector.load %arg6[%c0, %c0_0] : memref<256x128xf32, #tpu.memory_space<vmem>>, vector<256x128xf32>
    tpu.vector_store %arg6[%c0, %c0_0], %2 {strides = array<i32>} : memref<256x128xf32, #tpu.memory_space<vmem>>, vector<256x128xf32>,
    %c0_i32 = arith.constant 0 : i32
    %4 = arith.addi %1, %c0_i32 : i32
    %c0_1 = arith.constant 0 : index
    %5 = arith.index_cast %4 : i32 to index
    %c0_2 = arith.constant 0 : index
    %6 = vector.load %arg2[%c0_1, %5, %c0_2] : memref<1x512x15xbf16, #tpu.memory_space<vmem>>, vector<1x256x15xbf16>
    %7 = vector.shape_cast %6 : vector<1x256x15xbf16> to vector<256x15xbf16>
    %c0_3 = arith.constant 0 : index
    %c0_4 = arith.constant 0 : index
    %c0_5 = arith.constant 0 : index
    %8 = vector.load %arg3[%c0_3, %c0_4, %c0_5] : memref<1x15x128xbf16, #tpu.memory_space<vmem>>, vector<1x15x128xbf16>
    %9 = vector.shape_cast %8 : vector<1x15x128xbf16> to vector<15x128xbf16>
    %c0_6 = arith.constant 0 : index
    %c0_7 = arith.constant 0 : index
    %10 = vector.load %arg6[%c0_6, %c0_7] : memref<256x128xf32, #tpu.memory_space<vmem>>, vector<256x128xf32>
    %cst_8 = arith.constant dense<0.000000e+00> : vector<256x128xf32>
    %11 = tpu.matmul %7, %9, %cst_8 {dimension_numbers = #tpu.dot_dimension_numbers<[1], [0], [0], [1], [0, 0, 1, 1], [], []>} : vector<256x15xbf16>, vector<15x128xbf16>, vector<256x128xf32> -> vector<256x128xf32>
    %12 = arith.addf %10, %11 : vector<256x128xf32>
    %c0_9 = arith.constant 0 : index
    %c0_10 = arith.constant 0 : index
    %13 = vector.load %arg6[%c0_9, %c0_10] : memref<256x128xf32, #tpu.memory_space<vmem>>, vector<256x128xf32>
    tpu.vector_store %arg6[%c0_9, %c0_10], %12 {strides = array<i32>} : memref<256x128xf32, #tpu.memory_space<vmem>>, vector<256x128xf32>,
    %c0_11 = arith.constant 0 : index
    %c0_12 = arith.constant 0 : index
    %14 = vector.load %arg6[%c0_11, %c0_12] : memref<256x128xf32, #tpu.memory_space<vmem>>, vector<256x128xf32>
    %c0_13 = arith.constant 0 : index
    %c0_14 = arith.constant 0 : index
    %15 = vector.load %arg4[%c0_13, %c0_14] : memref<1x128xf32, #tpu.memory_space<vmem>>, vector<1x128xf32>
    %16 = vector.broadcast %15 : vector<1x128xf32> to vector<256x128xf32>
    %17 = arith.addf %14, %16 : vector<256x128xf32>
    %cst_15 = arith.constant 0.000000e+00 : f32
    %18 = vector.broadcast %cst_15 : f32 to vector<256x128xf32>
    %19 = arith.cmpf oge, %17, %18 : vector<256x128xf32>
    %cst_16 = arith.constant 1.000000e-01 : f32
    %20 = vector.broadcast %cst_16 : f32 to vector<256x128xf32>
    %21 = arith.mulf %20, %17 : vector<256x128xf32>
    %22 = arith.select %19, %17, %21 : vector<256x128xi1>, vector<256x128xf32>
    %23 = arith.truncf %22 : vector<256x128xf32> to vector<256x128xbf16>
    %c0_17 = arith.constant 0 : index
    %c0_18 = arith.constant 0 : index
    %c0_19 = arith.constant 0 : index
    %24 = vector.load %arg5[%c0_17, %c0_18, %c0_19] : memref<1x256x128xbf16, #tpu.memory_space<vmem>>, vector<1x256x128xbf16>
    %25 = vector.shape_cast %24 : vector<1x256x128xbf16> to vector<256x128xbf16>
    %26 = vector.shape_cast %23 : vector<256x128xbf16> to vector<1x256x128xbf16>
    tpu.vector_store %arg5[%c0_17, %c0_18, %c0_19], %26 {strides = array<i32>} : memref<1x256x128xbf16, #tpu.memory_space<vmem>>, vector<1x256x128xbf16>,
    return
  }
  func.func @transform_0(%arg0: i32, %arg1: i32) -> (i32, i32, i32) {
    %c0_i32 = arith.constant 0 : i32
    %c0_i32_0 = arith.constant 0 : i32
    %c0_i32_1 = arith.constant 0 : i32
    return %arg0, %c0_i32, %c0_i32_0 : i32, i32, i32
  }
  func.func @transform_1(%arg0: i32, %arg1: i32) -> (i32, i32, i32) {
    %c0_i32 = arith.constant 0 : i32
    %c0_i32_0 = arith.constant 0 : i32
    %c0_i32_1 = arith.constant 0 : i32
    %c0_i32_2 = arith.constant 0 : i32
    return %c0_i32, %c0_i32_0, %c0_i32_1 : i32, i32, i32
  }
  func.func @transform_2(%arg0: i32, %arg1: i32) -> (i32, i32) {
    %c0_i32 = arith.constant 0 : i32
    %c0_i32_0 = arith.constant 0 : i32
    %c0_i32_1 = arith.constant 0 : i32
    return %c0_i32, %c0_i32_0 : i32, i32
  }
  func.func @transform_3(%arg0: i32, %arg1: i32) -> (i32, i32, i32) {
    %c0_i32 = arith.constant 0 : i32
    %c0_i32_0 = arith.constant 0 : i32
    return %arg0, %arg1, %c0_i32 : i32, i32, i32
  }
}

module attributes {stable_mosaic.version = 11 : i64} {
  func.func @_conv1d_kernel(%arg0: i32, %arg1: i32, %arg2: memref<1x512x15xbf16, #tpu.memory_space<vmem>>, %arg3: memref<1x15x128xbf16, #tpu.memory_space<vmem>>, %arg4: memref<1x128xf32, #tpu.memory_space<vmem>>, %arg5: memref<1x256x128xbf16, #tpu.memory_space<vmem>>, %arg6: memref<256x128xf32, #tpu.memory_space<vmem>>) attributes {dimension_semantics = [#tpu.dimension_semantics<parallel>, #tpu.dimension_semantics<parallel>], iteration_bounds = array<i64: 2, 2>, scalar_prefetch = 0 : i64, scratch_operands = 1 : i64, tpu.core_type = #tpu.core_type<tc>, window_params = [{transform_indices = @transform_0, window_bounds = array<i64: 1, 512, 15>}, {pipeline_mode = #tpu.pipeline_mode<synchronous>, transform_indices = @transform_1, window_bounds = array<i64: 1, 15, 128>}, {pipeline_mode = #tpu.pipeline_mode<synchronous>, transform_indices = @transform_2, window_bounds = array<i64: 1, 128>}, {transform_indices = @transform_3, window_bounds = array<i64: 1, 256, 128>}]} {
    %c256_i32 = arith.constant 256 : i32
    %0 = arith.muli %arg1, %c256_i32 : i32
    %1 = tpu.assume_multiple %0, 8 : i32
    %cst = arith.constant 0.000000e+00 : f32
    %2 = vector.broadcast %cst : f32 to vector<256x128xf32>
    %c0 = arith.constant 0 : index
    %c0_0 = arith.constant 0 : index
    %3 = vector.load %arg6[%c0, %c0_0] : memref<256x128xf32, #tpu.memory_space<vmem>>, vector<256x128xf32>
    tpu.vector_store %arg6[%c0, %c0_0], %2 {strides = array<i32>} : memref<256x128xf32, #tpu.memory_space<vmem>>, vector<256x128xf32>,
    %c0_i32 = arith.constant 0 : i32
    %4 = arith.addi %1, %c0_i32 : i32
    %c0_1 = arith.constant 0 : index
    %5 = arith.index_cast %4 : i32 to index
    %c0_2 = arith.constant 0 : index
    %6 = vector.load %arg2[%c0_1, %5, %c0_2] : memref<1x512x15xbf16, #tpu.memory_space<vmem>>, vector<1x256x15xbf16>
    %7 = vector.shape_cast %6 : vector<1x256x15xbf16> to vector<256x15xbf16>
    %c0_3 = arith.constant 0 : index
    %c0_4 = arith.constant 0 : index
    %c0_5 = arith.constant 0 : index
    %8 = vector.load %arg3[%c0_3, %c0_4, %c0_5] : memref<1x15x128xbf16, #tpu.memory_space<vmem>>, vector<1x15x128xbf16>
    %9 = vector.shape_cast %8 : vector<1x15x128xbf16> to vector<15x128xbf16>
    %c0_6 = arith.constant 0 : index
    %c0_7 = arith.constant 0 : index
    %10 = vector.load %arg6[%c0_6, %c0_7] : memref<256x128xf32, #tpu.memory_space<vmem>>, vector<256x128xf32>
    %cst_8 = arith.constant dense<0.000000e+00> : vector<256x128xf32>
    %11 = tpu.matmul %7, %9, %cst_8 {dimension_numbers = #tpu.dot_dimension_numbers<[1], [0], [0], [1], [0, 0, 1, 1], [], []>} : vector<256x15xbf16>, vector<15x128xbf16>, vector<256x128xf32> -> vector<256x128xf32>
    %12 = arith.addf %10, %11 : vector<256x128xf32>
    %c0_9 = arith.constant 0 : index
    %c0_10 = arith.constant 0 : index
    %13 = vector.load %arg6[%c0_9, %c0_10] : memref<256x128xf32, #tpu.memory_space<vmem>>, vector<256x128xf32>
    tpu.vector_store %arg6[%c0_9, %c0_10], %12 {strides = array<i32>} : memref<256x128xf32, #tpu.memory_space<vmem>>, vector<256x128xf32>,
    %c0_11 = arith.constant 0 : index
    %c0_12 = arith.constant 0 : index
    %14 = vector.load %arg6[%c0_11, %c0_12] : memref<256x128xf32, #tpu.memory_space<vmem>>, vector<256x128xf32>
    %c0_13 = arith.constant 0 : index
    %c0_14 = arith.constant 0 : index
    %15 = vector.load %arg4[%c0_13, %c0_14] : memref<1x128xf32, #tpu.memory_space<vmem>>, vector<1x128xf32>
    %16 = vector.broadcast %15 : vector<1x128xf32> to vector<256x128xf32>
    %17 = arith.addf %14, %16 : vector<256x128xf32>
    %cst_15 = arith.constant 0.000000e+00 : f32
    %18 = vector.broadcast %cst_15 : f32 to vector<256x128xf32>
    %19 = arith.cmpf oge, %17, %18 : vector<256x128xf32>
    %cst_16 = arith.constant 1.000000e-01 : f32
    %20 = vector.broadcast %cst_16 : f32 to vector<256x128xf32>
    %21 = arith.mulf %20, %17 : vector<256x128xf32>
    %22 = arith.select %19, %17, %21 : vector<256x128xi1>, vector<256x128xf32>
    %23 = arith.truncf %22 : vector<256x128xf32> to vector<256x128xbf16>
    %c0_17 = arith.constant 0 : index
    %c0_18 = arith.constant 0 : index
    %c0_19 = arith.constant 0 : index
    %24 = vector.load %arg5[%c0_17, %c0_18, %c0_19] : memref<1x256x128xbf16, #tpu.memory_space<vmem>>, vector<1x256x128xbf16>
    %25 = vector.shape_cast %24 : vector<1x256x128xbf16> to vector<256x128xbf16>
    %26 = vector.shape_cast %23 : vector<256x128xbf16> to vector<1x256x128xbf16>
    tpu.vector_store %arg5[%c0_17, %c0_18, %c0_19], %26 {strides = array<i32>} : memref<1x256x128xbf16, #tpu.memory_space<vmem>>, vector<1x256x128xbf16>,
    return
  }
  func.func @transform_0(%arg0: i32, %arg1: i32) -> (i32, i32, i32) {
    %c0_i32 = arith.constant 0 : i32
    %c0_i32_0 = arith.constant 0 : i32
    %c0_i32_1 = arith.constant 0 : i32
    return %arg0, %c0_i32, %c0_i32_0 : i32, i32, i32
  }
  func.func @transform_1(%arg0: i32, %arg1: i32) -> (i32, i32, i32) {
    %c0_i32 = arith.constant 0 : i32
    %c0_i32_0 = arith.constant 0 : i32
    %c0_i32_1 = arith.constant 0 : i32
    %c0_i32_2 = arith.constant 0 : i32
    return %c0_i32, %c0_i32_0, %c0_i32_1 : i32, i32, i32
  }
  func.func @transform_2(%arg0: i32, %arg1: i32) -> (i32, i32) {
    %c0_i32 = arith.constant 0 : i32
    %c0_i32_0 = arith.constant 0 : i32
    %c0_i32_1 = arith.constant 0 : i32
    return %c0_i32, %c0_i32_0 : i32, i32
  }
  func.func @transform_3(%arg0: i32, %arg1: i32) -> (i32, i32, i32) {
    %c0_i32 = arith.constant 0 : i32
    %c0_i32_0 = arith.constant 0 : i32
    return %arg0, %arg1, %c0_i32 : i32, i32, i32
  }
}

</mosaic_0001>

<llo_original>
// kernel: tpu_custom_call.1
$region0: #{tpu_custom_call.1}
  #allocation0 [shape = 'u32[]', space=smem, size = 0x4, offset = 0x4, fixed_abs, tag = 'smem constant byte address 0x4 - core index']
  #allocation1 [shape = 'u32[144,128]{1,0:T(1,128)}', space=vmem, size = 0x12000, scoped, tag = 'internal scratch']
  #allocation2 [shape = 'f32[256,128]{1,0:T(8,128)}', space=vmem, size = 0x20000, scoped, tag = 'scratch operand']
  %s0 = inlined_call_operand.vmem [shape: bf16[2,512,15], index: 0, kind: input, shape index: {}]
  %s1 = inlined_call_operand.vmem [shape: bf16[1,15,128], index: 1, kind: input, shape index: {}]
  %s2 = inlined_call_operand.vmem [shape: f32[1,128], index: 2, kind: input, shape index: {}]
  %s3 = inlined_call_operand.hbm [shape: bf16[2,512,128], index: 3, kind: output, shape index: {}]
  %s4 = sld [smem:[#allocation0]]
  $region45: #{tpu_custom_call.1} parent=0
    _
  %s6 = ssub.s32 1, %s4
  %s7 = scalar_select 0, %s6, %s4
  $region1: #{tpu_custom_call.1} parent=0
    #allocation3 [shape = 'u8[131072]{0}', space=vmem, size = 0x20000, scoped, tag = 'output window, operand 0']
    #allocation4 [shape = 's32[2]{0}', space=sflag, size = 0x8, scoped, tag = 'scoped memory for tpu_custom_call.1']
    %8 = vsyncpa [#allocation4], 0
    %s9 = scalar_lea.sflag [#allocation4], 1
    %10 = vsyncpa %s9, 0
    loop: start=0, step=1, limit=6
    $region2: #{tpu_custom_call.1} parent=1 // loop_pre_header
      _
    $region3: #{tpu_custom_call.1} parent=1 // loop_header
      %s12 = sphi 0, %s16
      %p13 = scmp.ge.s32.totalorder %s12, 6
      %s19 = sphi 0, %s31
      %s20 = sphi 0, %s27
      %s21 = sphi 0, %s19
      %s22 = sphi 0, %s20
      %s23 = sphi 0, %s21
      %s24 = sphi 0, %s22
      %s34 = sphi 0, %s36
      %s37 = sphi 0, %s34
      %s38 = sphi 0, %s37
      %s54 = sphi 0, %s38
      %s58 = sphi 0, %s58
      %s60 = sphi 0, %s58
      %s61 = sphi 0, %s60
      %s75 = sphi 0, %s61
      %s79 = sphi 0, %s79
      %s81 = sphi 0, %s79
      %s82 = sphi 0, %s81
      %s96 = sphi 0, %s82
      %s104 = sphi 0, %s106
      %s107 = sphi 0, %s104
      %s108 = sphi 0, %s107
      %s124 = sphi 0, %s108
    $region4: #{tpu_custom_call.1} parent=1 // loop_header_branch
      %15 = sbr.rel (%p13) target = $region8
    $region5: #{tpu_custom_call.1} parent=1 // loop_body
      %s17 = ssub.s32 %s12, 1
      %s18 = ssub.s32 %s12, 2
      %s25 = sadd.s32 1, %s20
      %p26 = scmp.ge.s32.totalorder %s25, 2
      %s27 = scalar_select %p26, 0, %s25
      %s28 = sadd.s32 1, %s19
      %s29 = scalar_select %p26, %s28, %s19
      %p30 = scmp.ge.s32.totalorder %s29, 2
      %s31 = scalar_select %p30, 0, %s29
      %s32 = ssub.s32 %s19, %s31
      %p33 = scmp.eq.s32.totalorder %s32, 0
      %s35 = sadd.s32 %s34, 1
      %s36 = scalar_select %p33, %s34, %s35
      %p39 = pneg %p33
      %p40 = scmp.eq.s32.totalorder %s12, 3
      %p41 = por %p39, %p40
      %p42 = scmp.ne.s32.totalorder %s34, %s37
      %p43 = scmp.eq.s32.totalorder %s12, 0
      %p44 = por %p42, %p43
      %p45 = scmp.ne.s32.totalorder %s34, %s37
      %p46 = scmp.eq.s32.totalorder %s17, 3
      %p47 = por %p45, %p46
      %p48 = scmp.ne.s32.totalorder %s37, %s38
      %p49 = scmp.eq.s32.totalorder %s17, 0
      %p50 = por %p48, %p49
      %p51 = scmp.ne.s32.totalorder %s37, %s38
      %p52 = scmp.eq.s32.totalorder %s18, 3
      %p53 = por %p51, %p52
      %p55 = scmp.ne.s32.totalorder %s38, %s54
      %p56 = scmp.eq.s32.totalorder %s18, 0
      %p57 = por %p55, %p56
      %s59 = sadd.s32 %s58, 1
      %p62 = scmp.eq.s32.totalorder %s12, 3
      %p63 = scmp.ne.s32.totalorder %s58, %s60
      %p64 = scmp.eq.s32.totalorder %s12, 0
      %p65 = por %p63, %p64
      %p66 = scmp.ne.s32.totalorder %s58, %s60
      %p67 = scmp.eq.s32.totalorder %s17, 3
      %p68 = por %p66, %p67
      %p69 = scmp.ne.s32.totalorder %s60, %s61
      %p70 = scmp.eq.s32.totalorder %s17, 0
      %p71 = por %p69, %p70
      %p72 = scmp.ne.s32.totalorder %s60, %s61
      %p73 = scmp.eq.s32.totalorder %s18, 3
      %p74 = por %p72, %p73
      %p76 = scmp.ne.s32.totalorder %s61, %s75
      %p77 = scmp.eq.s32.totalorder %s18, 0
      %p78 = por %p76, %p77
      %s80 = sadd.s32 %s79, 1
      %p83 = scmp.eq.s32.totalorder %s12, 3
      %p84 = scmp.ne.s32.totalorder %s79, %s81
      %p85 = scmp.eq.s32.totalorder %s12, 0
      %p86 = por %p84, %p85
      %p87 = scmp.ne.s32.totalorder %s79, %s81
      %p88 = scmp.eq.s32.totalorder %s17, 3
      %p89 = por %p87, %p88
      %p90 = scmp.ne.s32.totalorder %s81, %s82
      %p91 = scmp.eq.s32.totalorder %s17, 0
      %p92 = por %p90, %p91
      %p93 = scmp.ne.s32.totalorder %s81, %s82
      %p94 = scmp.eq.s32.totalorder %s18, 3
      %p95 = por %p93, %p94
      %p97 = scmp.ne.s32.totalorder %s82, %s96
      %p98 = scmp.eq.s32.totalorder %s18, 0
      %p99 = por %p97, %p98
      %s100 = ssub.s32 %s19, %s31
      %s101 = ssub.s32 %s20, %s27
      %s102 = sor.u32 %s100, %s101
      %p103 = scmp.eq.s32.totalorder %s102, 0
      %s105 = sadd.s32 %s104, 1
      %s106 = scalar_select %p103, %s104, %s105
      %p109 = pneg %p103
      %p110 = scmp.eq.s32.totalorder %s12, 3
      %p111 = por %p109, %p110
      %p112 = scmp.ne.s32.totalorder %s104, %s107
      %p113 = scmp.eq.s32.totalorder %s12, 0
      %p114 = por %p112, %p113
      %p115 = scmp.ne.s32.totalorder %s104, %s107
      %p116 = scmp.eq.s32.totalorder %s17, 3
      %p117 = por %p115, %p116
      %p118 = scmp.ne.s32.totalorder %s107, %s108
      %p119 = scmp.eq.s32.totalorder %s17, 0
      %p120 = por %p118, %p119
      %p121 = scmp.ne.s32.totalorder %s107, %s108
      %p122 = scmp.eq.s32.totalorder %s18, 3
      %p123 = por %p121, %p122
      %p125 = scmp.ne.s32.totalorder %s108, %s124
      %p126 = scmp.eq.s32.totalorder %s18, 0
      %p127 = por %p125, %p126
      %p128 = scmp.le.s32.totalorder 1, %s12
      %p129 = scmp.lt.s32.totalorder %s12, 5
      %p130 = pnand %p128, %p129
      %p131 = pneg %p130
      // Predicated region
      $region9: #{tpu_custom_call.1} parent=5 // pred_check
        _
      $region10: #{tpu_custom_call.1} parent=5 // pred_check_branch
        %133 = sbr.rel (%p130) target = $region12
      $region11: #{tpu_custom_call.1} parent=5 // pred_region
        %s134 = ssub.s32 %s12, 1
        // Predicated region
        $region13: #{tpu_custom_call.1} parent=11 // pred_check
          %p135 = pneg %p71
        $region14: #{tpu_custom_call.1} parent=11 // pred_check_branch
          %137 = sbr.rel (%p135) target = $region16
        $region15: #{tpu_custom_call.1} parent=11 // pred_region
          _
        $region16: #{tpu_custom_call.1} parent=11 // pred_fallthru
          _
        // Predicated region
        $region17: #{tpu_custom_call.1} parent=11 // pred_check
          %p138 = pneg %p92
        $region18: #{tpu_custom_call.1} parent=11 // pred_check_branch
          %140 = sbr.rel (%p138) target = $region20
        $region19: #{tpu_custom_call.1} parent=11 // pred_region
          _
        $region20: #{tpu_custom_call.1} parent=11 // pred_fallthru
          _
      $region12: #{tpu_custom_call.1} parent=5 // pred_fallthru
        _
      %p141 = scmp.lt.s32.totalorder %s12, 4
      // Predicated region
      $region21: #{tpu_custom_call.1} parent=5 // pred_check
        %p142 = pneg %p141
      $region22: #{tpu_custom_call.1} parent=5 // pred_check_branch
        %144 = sbr.rel (%p142) target = $region24
      $region23: #{tpu_custom_call.1} parent=5 // pred_region
        // Predicated region
        $region25: #{tpu_custom_call.1} parent=23 // pred_check
          %p145 = pneg %p44
        $region26: #{tpu_custom_call.1} parent=23 // pred_check_branch
          %147 = sbr.rel (%p145) target = $region28
        $region27: #{tpu_custom_call.1} parent=23 // pred_region
          %p148 = scmp.lt.s32.totalorder %s19, 1
          %s149 = scalar_select %p148, %s19, 1
          %s150 = smul.addr %s149, 64
          %s151 = smul.addr %s150, 4
          %s152 = scalar_lea.vmem %s0, %s151
        $region28: #{tpu_custom_call.1} parent=23 // pred_fallthru
          _
      $region24: #{tpu_custom_call.1} parent=5 // pred_fallthru
        _
      %p153 = scmp.le.s32.totalorder 1, %s12
      %p154 = scmp.lt.s32.totalorder %s12, 5
      %p155 = pnand %p153, %p154
      %p156 = pneg %p155
      // Predicated region
      $region29: #{tpu_custom_call.1} parent=5 // pred_check
        _
      $region30: #{tpu_custom_call.1} parent=5 // pred_check_branch
        %158 = sbr.rel (%p155) target = $region32
      $region31: #{tpu_custom_call.1} parent=5 // pred_region
        %s159 = ssub.s32 %s12, 1
        %p160 = scmp.lt.s32.totalorder %s21, 1
        %s161 = scalar_select %p160, %s21, 1
        %s162 = smul.addr %s161, 64
        %s163 = smul.addr %s162, 4
        %s164 = scalar_lea.vmem %s0, %s163
        %p165 = pneg %p50
        %p166 = pneg %p47
        %p167 = pneg %p71
        %p168 = pneg %p68
        %p169 = pneg %p92
        %p170 = pneg %p89
        %p171 = pneg %p120
        %p172 = pneg %p117
        %s173 = sand.u32 %s107, 1
        %s174 = scalar_lea.sflag [#allocation4], %s173
        %s175 = sand.u32 %s107, 1
        %s176 = smul.addr %s175, 128
        %s177 = scalar_lea.vmem [#allocation3], %s176
        %p178 = scmp.lt.s32.totalorder %s21, 1
        %s179 = scalar_select %p178, %s21, 1
        %s180 = smul.addr %s179, 64
        %s181 = smul.addr %s180, 4
        %s182 = scalar_lea.vmem %s0, %s181
        %s183 = smul.u32 32, %s22
        %s185 = smul.u32 %s22, 256
        %186 = vst [vmem:[#allocation2] sm:$0xff] 0.0
        %187 = vst [vmem:[#allocation2 + $0x8] sm:$0xff] 0.0
        %188 = vst [vmem:[#allocation2 + $0x10] sm:$0xff] 0.0
        %189 = vst [vmem:[#allocation2 + $0x18] sm:$0xff] 0.0
        %190 = vst [vmem:[#allocation2 + $0x20] sm:$0xff] 0.0
        %191 = vst [vmem:[#allocation2 + $0x28] sm:$0xff] 0.0
        %192 = vst [vmem:[#allocation2 + $0x30] sm:$0xff] 0.0
        %193 = vst [vmem:[#allocation2 + $0x38] sm:$0xff] 0.0
        %194 = vst [vmem:[#allocation2 + $0x40] sm:$0xff] 0.0
        %195 = vst [vmem:[#allocation2 + $0x48] sm:$0xff] 0.0
        %196 = vst [vmem:[#allocation2 + $0x50] sm:$0xff] 0.0
        %197 = vst [vmem:[#allocation2 + $0x58] sm:$0xff] 0.0
        %198 = vst [vmem:[#allocation2 + $0x60] sm:$0xff] 0.0
        %199 = vst [vmem:[#allocation2 + $0x68] sm:$0xff] 0.0
        %200 = vst [vmem:[#allocation2 + $0x70] sm:$0xff] 0.0
        %201 = vst [vmem:[#allocation2 + $0x78] sm:$0xff] 0.0
        %202 = vst [vmem:[#allocation2 + $0x80] sm:$0xff] 0.0
        %203 = vst [vmem:[#allocation2 + $0x88] sm:$0xff] 0.0
        %204 = vst [vmem:[#allocation2 + $0x90] sm:$0xff] 0.0
        %205 = vst [vmem:[#allocation2 + $0x98] sm:$0xff] 0.0
        %206 = vst [vmem:[#allocation2 + $0xa0] sm:$0xff] 0.0
        %207 = vst [vmem:[#allocation2 + $0xa8] sm:$0xff] 0.0
        %208 = vst [vmem:[#allocation2 + $0xb0] sm:$0xff] 0.0
        %209 = vst [vmem:[#allocation2 + $0xb8] sm:$0xff] 0.0
        %210 = vst [vmem:[#allocation2 + $0xc0] sm:$0xff] 0.0
        %211 = vst [vmem:[#allocation2 + $0xc8] sm:$0xff] 0.0
        %212 = vst [vmem:[#allocation2 + $0xd0] sm:$0xff] 0.0
        %213 = vst [vmem:[#allocation2 + $0xd8] sm:$0xff] 0.0
        %214 = vst [vmem:[#allocation2 + $0xe0] sm:$0xff] 0.0
        %215 = vst [vmem:[#allocation2 + $0xe8] sm:$0xff] 0.0
        %216 = vst [vmem:[#allocation2 + $0xf0] sm:$0xff] 0.0
        %217 = vst [vmem:[#allocation2 + $0xf8] sm:$0xff] 0.0
        %s218 = sshra.s32 %s185, 3
        %s219 = sand.u32 %s185, 7
        %s220 = smul.addr %s218, 4
        %s221 = scalar_lea.vmem %s182, %s220
        %v222 = vld [vmem:[%s221] sm:$0xf]
        %v223 = vld [vmem:[%s221 + $0x4] sm:$0xf]
        %v224 = vld [vmem:[%s221 + $0x8] sm:$0xf]
        %v225 = vld [vmem:[%s221 + $0xc] sm:$0xf]
        %v226 = vld [vmem:[%s221 + $0x10] sm:$0xf]
        %v227 = vld [vmem:[%s221 + $0x14] sm:$0xf]
        %v228 = vld [vmem:[%s221 + $0x18] sm:$0xf]
        %v229 = vld [vmem:[%s221 + $0x1c] sm:$0xf]
        %v230 = vld [vmem:[%s221 + $0x20] sm:$0xf]
        %v231 = vld [vmem:[%s221 + $0x24] sm:$0xf]
        %v232 = vld [vmem:[%s221 + $0x28] sm:$0xf]
        %v233 = vld [vmem:[%s221 + $0x2c] sm:$0xf]
        %v234 = vld [vmem:[%s221 + $0x30] sm:$0xf]
        %v235 = vld [vmem:[%s221 + $0x34] sm:$0xf]
        %v236 = vld [vmem:[%s221 + $0x38] sm:$0xf]
        %v237 = vld [vmem:[%s221 + $0x3c] sm:$0xf]
        %v238 = vld [vmem:[%s221 + $0x40] sm:$0xf]
        %v239 = vld [vmem:[%s221 + $0x44] sm:$0xf]
        %v240 = vld [vmem:[%s221 + $0x48] sm:$0xf]
        %v241 = vld [vmem:[%s221 + $0x4c] sm:$0xf]
        %v242 = vld [vmem:[%s221 + $0x50] sm:$0xf]
        %v243 = vld [vmem:[%s221 + $0x54] sm:$0xf]
        %v244 = vld [vmem:[%s221 + $0x58] sm:$0xf]
        %v245 = vld [vmem:[%s221 + $0x5c] sm:$0xf]
        %v246 = vld [vmem:[%s221 + $0x60] sm:$0xf]
        %v247 = vld [vmem:[%s221 + $0x64] sm:$0xf]
        %v248 = vld [vmem:[%s221 + $0x68] sm:$0xf]
        %v249 = vld [vmem:[%s221 + $0x6c] sm:$0xf]
        %v250 = vld [vmem:[%s221 + $0x70] sm:$0xf]
        %v251 = vld [vmem:[%s221 + $0x74] sm:$0xf]
        %v252 = vld [vmem:[%s221 + $0x78] sm:$0xf]
        %v253 = vld [vmem:[%s221 + $0x7c] sm:$0xf]
        %v254 = vld [vmem:[%s1] sm:$0xf]
        %v255 = vld [vmem:[%s1 + $0x4] sm:$0xf]
        %v256 = vld [vmem:[#allocation2] sm:$0xff]
        %v257 = vld [vmem:[#allocation2 + $0x8] sm:$0xff]
        %v258 = vld [vmem:[#allocation2 + $0x10] sm:$0xff]
        %v259 = vld [vmem:[#allocation2 + $0x18] sm:$0xff]
        %v260 = vld [vmem:[#allocation2 + $0x20] sm:$0xff]
        %v261 = vld [vmem:[#allocation2 + $0x28] sm:$0xff]
        %v262 = vld [vmem:[#allocation2 + $0x30] sm:$0xff]
        %v263 = vld [vmem:[#allocation2 + $0x38] sm:$0xff]
        %v264 = vld [vmem:[#allocation2 + $0x40] sm:$0xff]
        %v265 = vld [vmem:[#allocation2 + $0x48] sm:$0xff]
        %v266 = vld [vmem:[#allocation2 + $0x50] sm:$0xff]
        %v267 = vld [vmem:[#allocation2 + $0x58] sm:$0xff]
        %v268 = vld [vmem:[#allocation2 + $0x60] sm:$0xff]
        %v269 = vld [vmem:[#allocation2 + $0x68] sm:$0xff]
        %v270 = vld [vmem:[#allocation2 + $0x70] sm:$0xff]
        %v271 = vld [vmem:[#allocation2 + $0x78] sm:$0xff]
        %v272 = vld [vmem:[#allocation2 + $0x80] sm:$0xff]
        %v273 = vld [vmem:[#allocation2 + $0x88] sm:$0xff]
        %v274 = vld [vmem:[#allocation2 + $0x90] sm:$0xff]
        %v275 = vld [vmem:[#allocation2 + $0x98] sm:$0xff]
        %v276 = vld [vmem:[#allocation2 + $0xa0] sm:$0xff]
        %v277 = vld [vmem:[#allocation2 + $0xa8] sm:$0xff]
        %v278 = vld [vmem:[#allocation2 + $0xb0] sm:$0xff]
        %v279 = vld [vmem:[#allocation2 + $0xb8] sm:$0xff]
        %v280 = vld [vmem:[#allocation2 + $0xc0] sm:$0xff]
        %v281 = vld [vmem:[#allocation2 + $0xc8] sm:$0xff]
        %v282 = vld [vmem:[#allocation2 + $0xd0] sm:$0xff]
        %v283 = vld [vmem:[#allocation2 + $0xd8] sm:$0xff]
        %v284 = vld [vmem:[#allocation2 + $0xe0] sm:$0xff]
        %v285 = vld [vmem:[#allocation2 + $0xe8] sm:$0xff]
        %v286 = vld [vmem:[#allocation2 + $0xf0] sm:$0xff]
        %v287 = vld [vmem:[#allocation2 + $0xf8] sm:$0xff]
        %v320 = vunpack.c.l.b16 %v222
        %v321 = vunpack.c.l.b16 %v223
        %v322 = vunpack.c.l.b16 %v224
        %v323 = vunpack.c.l.b16 %v225
        %v324 = vunpack.c.l.b16 %v226
        %v325 = vunpack.c.l.b16 %v227
        %v326 = vunpack.c.l.b16 %v228
        %v327 = vunpack.c.l.b16 %v229
        %v328 = vunpack.c.l.b16 %v230
        %v329 = vunpack.c.l.b16 %v231
        %v330 = vunpack.c.l.b16 %v232
        %v331 = vunpack.c.l.b16 %v233
        %v332 = vunpack.c.l.b16 %v234
        %v333 = vunpack.c.l.b16 %v235
        %v334 = vunpack.c.l.b16 %v236
        %v335 = vunpack.c.l.b16 %v237
        %v336 = vunpack.c.l.b16 %v238
        %v337 = vunpack.c.l.b16 %v239
        %v338 = vunpack.c.l.b16 %v240
        %v339 = vunpack.c.l.b16 %v241
        %v340 = vunpack.c.l.b16 %v242
        %v341 = vunpack.c.l.b16 %v243
        %v342 = vunpack.c.l.b16 %v244
        %v343 = vunpack.c.l.b16 %v245
        %v344 = vunpack.c.l.b16 %v246
        %v345 = vunpack.c.l.b16 %v247
        %v346 = vunpack.c.l.b16 %v248
        %v347 = vunpack.c.l.b16 %v249
        %v348 = vunpack.c.l.b16 %v250
        %v349 = vunpack.c.l.b16 %v251
        %v350 = vunpack.c.l.b16 %v252
        %v351 = vunpack.c.l.b16 %v253
        %v352 = vpack.c.b16 %v321, %v320
        %v353 = vpack.c.b16 %v323, %v322
        %v354 = vpack.c.b16 %v325, %v324
        %v355 = vpack.c.b16 %v327, %v326
        %v356 = vpack.c.b16 %v329, %v328
        %v357 = vpack.c.b16 %v331, %v330
        %v358 = vpack.c.b16 %v333, %v332
        %v359 = vpack.c.b16 %v335, %v334
        %v360 = vpack.c.b16 %v337, %v336
        %v361 = vpack.c.b16 %v339, %v338
        %v362 = vpack.c.b16 %v341, %v340
        %v363 = vpack.c.b16 %v343, %v342
        %v364 = vpack.c.b16 %v345, %v344
        %v365 = vpack.c.b16 %v347, %v346
        %v366 = vpack.c.b16 %v349, %v348
        %v367 = vpack.c.b16 %v351, %v350
        %v370 = vunpack.c.l.b16 %v254
        %v371 = vunpack.c.l.b16 %v255
        %v372 = vpack.c.b16 %v371, %v370
        %vm373 = vcmask 121856
        %v375 = vsel %vm373, %v352, 0
        %v378 = vsel %vm373, %v353, 0
        %v381 = vsel %vm373, %v354, 0
        %v384 = vsel %vm373, %v355, 0
        %v387 = vsel %vm373, %v356, 0
        %v390 = vsel %vm373, %v357, 0
        %v393 = vsel %vm373, %v358, 0
        %v396 = vsel %vm373, %v359, 0
        %v399 = vsel %vm373, %v360, 0
        %v402 = vsel %vm373, %v361, 0
        %v405 = vsel %vm373, %v362, 0
        %v408 = vsel %vm373, %v363, 0
        %v411 = vsel %vm373, %v364, 0
        %v414 = vsel %vm373, %v365, 0
        %v417 = vsel %vm373, %v366, 0
        %v420 = vsel %vm373, %v367, 0
        %vm422 = vcmask 1046528
        %vm423 = vcmask 1047552
        %v424 = vsel %vm422, 4294967295, 65535
        %v425 = vsel %vm423, %v424, 0
        %v427 = vand.u32 %v372, %v425
        %429 = vmatprep.subr.bf16.mxu0 0
        %430 = vmatpush1.bf16.msra.mxu0 0
        %431 = vmatprep.subr.bf16.mxu0 0
        %432 = vmatpush1.bf16.msra.mxu0 0
        %433 = vmatprep.subr.bf16.mxu0 0
        %434 = vmatpush1.bf16.msra.mxu0 0
        %435 = vmatprep.subr.bf16.mxu0 0
        %436 = vmatpush1.bf16.msra.mxu0 0
        %437 = vmatprep.subr.bf16.mxu0 0
        %438 = vmatpush1.bf16.msra.mxu0 0
        %439 = vmatprep.subr.bf16.mxu0 0
        %440 = vmatpush1.bf16.msra.mxu0 0
        %441 = vmatprep.subr.bf16.mxu0 0
        %442 = vmatpush1.bf16.msra.mxu0 0
        %443 = vmatprep.subr.bf16.mxu0 0
        %444 = vmatpush1.bf16.msra.mxu0 %v427
        %445 = vmatprep.subr.bf16.mxu0 0
        %446 = vmatpush2.bf16.msra.mxu0 0
        %447 = vmatprep.subr.bf16.mxu0 0
        %448 = vmatpush2.bf16.msra.mxu0 0
        %449 = vmatprep.subr.bf16.mxu0 0
        %450 = vmatpush2.bf16.msra.mxu0 0
        %451 = vmatprep.subr.bf16.mxu0 0
        %452 = vmatpush2.bf16.msra.mxu0 0
        %453 = vmatprep.subr.bf16.mxu0 0
        %454 = vmatpush2.bf16.msra.mxu0 0
        %455 = vmatprep.subr.bf16.mxu0 0
        %456 = vmatpush2.bf16.msra.mxu0 0
        %457 = vmatprep.subr.bf16.mxu0 0
        %458 = vmatpush2.bf16.msra.mxu0 0
        %459 = vmatprep.subr.bf16.mxu0 0
        %460 = vmatpush2.bf16.msra.mxu0 0
        %461 = vmatprep.mubr.bf16.mxu0 0
        %462 = vmatmul.mubr.bf16.gmra.mxu0 %v375
        %v463 = vpop.f32.mrf.mxu0
        %v464 = vadd.f32 0.0, %v463
        %v465 = vpop.f32.mrf.mxu0
        %v466 = vpop.f32.mrf.mxu0
        %v467 = vadd.f32 0.0, %v466
        %v468 = vpop.f32.mrf.mxu0
        %469 = vmatprep.mubr.bf16.mxu0 0
        %470 = vmatmul.mubr.bf16.gmra.mxu0 %v378
        %v471 = vpop.f32.mrf.mxu0
        %v472 = vadd.f32 0.0, %v471
        %v473 = vpop.f32.mrf.mxu0
        %v474 = vpop.f32.mrf.mxu0
        %v475 = vadd.f32 0.0, %v474
        %v476 = vpop.f32.mrf.mxu0
        %477 = vmatprep.mubr.bf16.mxu0 0
        %478 = vmatmul.mubr.bf16.gmra.mxu0 %v381
        %v479 = vpop.f32.mrf.mxu0
        %v480 = vadd.f32 0.0, %v479
        %v481 = vpop.f32.mrf.mxu0
        %v482 = vpop.f32.mrf.mxu0
        %v483 = vadd.f32 0.0, %v482
        %v484 = vpop.f32.mrf.mxu0
        %485 = vmatprep.mubr.bf16.mxu0 0
        %486 = vmatmul.mubr.bf16.gmra.mxu0 %v384
        %v487 = vpop.f32.mrf.mxu0
        %v488 = vadd.f32 0.0, %v487
        %v489 = vpop.f32.mrf.mxu0
        %v490 = vpop.f32.mrf.mxu0
        %v491 = vadd.f32 0.0, %v490
        %v492 = vpop.f32.mrf.mxu0
        %493 = vmatprep.mubr.bf16.mxu0 0
        %494 = vmatmul.mubr.bf16.gmra.mxu0 %v387
        %v495 = vpop.f32.mrf.mxu0
        %v496 = vadd.f32 0.0, %v495
        %v497 = vpop.f32.mrf.mxu0
        %v498 = vpop.f32.mrf.mxu0
        %v499 = vadd.f32 0.0, %v498
        %v500 = vpop.f32.mrf.mxu0
        %501 = vmatprep.mubr.bf16.mxu0 0
        %502 = vmatmul.mubr.bf16.gmra.mxu0 %v390
        %v503 = vpop.f32.mrf.mxu0
        %v504 = vadd.f32 0.0, %v503
        %v505 = vpop.f32.mrf.mxu0
        %v506 = vpop.f32.mrf.mxu0
        %v507 = vadd.f32 0.0, %v506
        %v508 = vpop.f32.mrf.mxu0
        %509 = vmatprep.mubr.bf16.mxu0 0
        %510 = vmatmul.mubr.bf16.gmra.mxu0 %v393
        %v511 = vpop.f32.mrf.mxu0
        %v512 = vadd.f32 0.0, %v511
        %v513 = vpop.f32.mrf.mxu0
        %v514 = vpop.f32.mrf.mxu0
        %v515 = vadd.f32 0.0, %v514
        %v516 = vpop.f32.mrf.mxu0
        %517 = vmatprep.mubr.bf16.mxu0 0
        %518 = vmatmul.mubr.bf16.gmra.mxu0 %v396
        %v519 = vpop.f32.mrf.mxu0
        %v520 = vadd.f32 0.0, %v519
        %v521 = vpop.f32.mrf.mxu0
        %v522 = vpop.f32.mrf.mxu0
        %v523 = vadd.f32 0.0, %v522
        %v524 = vpop.f32.mrf.mxu0
        %525 = vmatprep.mubr.bf16.mxu0 0
        %526 = vmatmul.mubr.bf16.gmra.mxu0 %v399
        %v527 = vpop.f32.mrf.mxu0
        %v528 = vadd.f32 0.0, %v527
        %v529 = vpop.f32.mrf.mxu0
        %v530 = vpop.f32.mrf.mxu0
        %v531 = vadd.f32 0.0, %v530
        %v532 = vpop.f32.mrf.mxu0
        %533 = vmatprep.mubr.bf16.mxu0 0
        %534 = vmatmul.mubr.bf16.gmra.mxu0 %v402
        %v535 = vpop.f32.mrf.mxu0
        %v536 = vadd.f32 0.0, %v535
        %v537 = vpop.f32.mrf.mxu0
        %v538 = vpop.f32.mrf.mxu0
        %v539 = vadd.f32 0.0, %v538
        %v540 = vpop.f32.mrf.mxu0
        %541 = vmatprep.mubr.bf16.mxu0 0
        %542 = vmatmul.mubr.bf16.gmra.mxu0 %v405
        %v543 = vpop.f32.mrf.mxu0
        %v544 = vadd.f32 0.0, %v543
        %v545 = vpop.f32.mrf.mxu0
        %v546 = vpop.f32.mrf.mxu0
        %v547 = vadd.f32 0.0, %v546
        %v548 = vpop.f32.mrf.mxu0
        %549 = vmatprep.mubr.bf16.mxu0 0
        %550 = vmatmul.mubr.bf16.gmra.mxu0 %v408
        %v551 = vpop.f32.mrf.mxu0
        %v552 = vadd.f32 0.0, %v551
        %v553 = vpop.f32.mrf.mxu0
        %v554 = vpop.f32.mrf.mxu0
        %v555 = vadd.f32 0.0, %v554
        %v556 = vpop.f32.mrf.mxu0
        %557 = vmatprep.mubr.bf16.mxu0 0
        %558 = vmatmul.mubr.bf16.gmra.mxu0 %v411
        %v559 = vpop.f32.mrf.mxu0
        %v560 = vadd.f32 0.0, %v559
        %v561 = vpop.f32.mrf.mxu0
        %v562 = vpop.f32.mrf.mxu0
        %v563 = vadd.f32 0.0, %v562
        %v564 = vpop.f32.mrf.mxu0
        %565 = vmatprep.mubr.bf16.mxu0 0
        %566 = vmatmul.mubr.bf16.gmra.mxu0 %v414
        %v567 = vpop.f32.mrf.mxu0
        %v568 = vadd.f32 0.0, %v567
        %v569 = vpop.f32.mrf.mxu0
        %v570 = vpop.f32.mrf.mxu0
        %v571 = vadd.f32 0.0, %v570
        %v572 = vpop.f32.mrf.mxu0
        %573 = vmatprep.mubr.bf16.mxu0 0
        %574 = vmatmul.mubr.bf16.gmra.mxu0 %v417
        %v575 = vpop.f32.mrf.mxu0
        %v576 = vadd.f32 0.0, %v575
        %v577 = vpop.f32.mrf.mxu0
        %v578 = vpop.f32.mrf.mxu0
        %v579 = vadd.f32 0.0, %v578
        %v580 = vpop.f32.mrf.mxu0
        %581 = vmatprep.mubr.bf16.mxu0 0
        %582 = vmatmul.mubr.bf16.gmra.mxu0 %v420
        %v583 = vpop.f32.mrf.mxu0
        %v584 = vadd.f32 0.0, %v583
        %v585 = vpop.f32.mrf.mxu0
        %v586 = vpop.f32.mrf.mxu0
        %v587 = vadd.f32 0.0, %v586
        %v588 = vpop.f32.mrf.mxu0
        %589 = vdwg.mxu0
        %v590 = vadd.f32 %v256, %v464
        %v591 = vadd.f32 %v257, %v467
        %v592 = vadd.f32 %v258, %v472
        %v593 = vadd.f32 %v259, %v475
        %v594 = vadd.f32 %v260, %v480
        %v595 = vadd.f32 %v261, %v483
        %v596 = vadd.f32 %v262, %v488
        %v597 = vadd.f32 %v263, %v491
        %v598 = vadd.f32 %v264, %v496
        %v599 = vadd.f32 %v265, %v499
        %v600 = vadd.f32 %v266, %v504
        %v601 = vadd.f32 %v267, %v507
        %v602 = vadd.f32 %v268, %v512
        %v603 = vadd.f32 %v269, %v515
        %v604 = vadd.f32 %v270, %v520
        %v605 = vadd.f32 %v271, %v523
        %v606 = vadd.f32 %v272, %v528
        %v607 = vadd.f32 %v273, %v531
        %v608 = vadd.f32 %v274, %v536
        %v609 = vadd.f32 %v275, %v539
        %v610 = vadd.f32 %v276, %v544
        %v611 = vadd.f32 %v277, %v547
        %v612 = vadd.f32 %v278, %v552
        %v613 = vadd.f32 %v279, %v555
        %v614 = vadd.f32 %v280, %v560
        %v615 = vadd.f32 %v281, %v563
        %v616 = vadd.f32 %v282, %v568
        %v617 = vadd.f32 %v283, %v571
        %v618 = vadd.f32 %v284, %v576
        %v619 = vadd.f32 %v285, %v579
        %v620 = vadd.f32 %v286, %v584
        %v621 = vadd.f32 %v287, %v587
        %622 = vst [vmem:[#allocation2] sm:$0xff] %v590
        %623 = vst [vmem:[#allocation2 + $0x8] sm:$0xff] %v591
        %624 = vst [vmem:[#allocation2 + $0x10] sm:$0xff] %v592
        %625 = vst [vmem:[#allocation2 + $0x18] sm:$0xff] %v593
        %626 = vst [vmem:[#allocation2 + $0x20] sm:$0xff] %v594
        %627 = vst [vmem:[#allocation2 + $0x28] sm:$0xff] %v595
        %628 = vst [vmem:[#allocation2 + $0x30] sm:$0xff] %v596
        %629 = vst [vmem:[#allocation2 + $0x38] sm:$0xff] %v597
        %630 = vst [vmem:[#allocation2 + $0x40] sm:$0xff] %v598
        %631 = vst [vmem:[#allocation2 + $0x48] sm:$0xff] %v599
        %632 = vst [vmem:[#allocation2 + $0x50] sm:$0xff] %v600
        %633 = vst [vmem:[#allocation2 + $0x58] sm:$0xff] %v601
        %634 = vst [vmem:[#allocation2 + $0x60] sm:$0xff] %v602
        %635 = vst [vmem:[#allocation2 + $0x68] sm:$0xff] %v603
        %636 = vst [vmem:[#allocation2 + $0x70] sm:$0xff] %v604
        %637 = vst [vmem:[#allocation2 + $0x78] sm:$0xff] %v605
        %638 = vst [vmem:[#allocation2 + $0x80] sm:$0xff] %v606
        %639 = vst [vmem:[#allocation2 + $0x88] sm:$0xff] %v607
        %640 = vst [vmem:[#allocation2 + $0x90] sm:$0xff] %v608
        %641 = vst [vmem:[#allocation2 + $0x98] sm:$0xff] %v609
        %642 = vst [vmem:[#allocation2 + $0xa0] sm:$0xff] %v610
        %643 = vst [vmem:[#allocation2 + $0xa8] sm:$0xff] %v611
        %644 = vst [vmem:[#allocation2 + $0xb0] sm:$0xff] %v612
        %645 = vst [vmem:[#allocation2 + $0xb8] sm:$0xff] %v613
        %646 = vst [vmem:[#allocation2 + $0xc0] sm:$0xff] %v614
        %647 = vst [vmem:[#allocation2 + $0xc8] sm:$0xff] %v615
        %648 = vst [vmem:[#allocation2 + $0xd0] sm:$0xff] %v616
        %649 = vst [vmem:[#allocation2 + $0xd8] sm:$0xff] %v617
        %650 = vst [vmem:[#allocation2 + $0xe0] sm:$0xff] %v618
        %651 = vst [vmem:[#allocation2 + $0xe8] sm:$0xff] %v619
        %652 = vst [vmem:[#allocation2 + $0xf0] sm:$0xff] %v620
        %653 = vst [vmem:[#allocation2 + $0xf8] sm:$0xff] %v621
        %v654 = vld [vmem:[#allocation2] sm:$0xff]
        %v655 = vld [vmem:[#allocation2 + $0x8] sm:$0xff]
        %v656 = vld [vmem:[#allocation2 + $0x10] sm:$0xff]
        %v657 = vld [vmem:[#allocation2 + $0x18] sm:$0xff]
        %v658 = vld [vmem:[#allocation2 + $0x20] sm:$0xff]
        %v659 = vld [vmem:[#allocation2 + $0x28] sm:$0xff]
        %v660 = vld [vmem:[#allocation2 + $0x30] sm:$0xff]
        %v661 = vld [vmem:[#allocation2 + $0x38] sm:$0xff]
        %v662 = vld [vmem:[#allocation2 + $0x40] sm:$0xff]
        %v663 = vld [vmem:[#allocation2 + $0x48] sm:$0xff]
        %v664 = vld [vmem:[#allocation2 + $0x50] sm:$0xff]
        %v665 = vld [vmem:[#allocation2 + $0x58] sm:$0xff]
        %v666 = vld [vmem:[#allocation2 + $0x60] sm:$0xff]
        %v667 = vld [vmem:[#allocation2 + $0x68] sm:$0xff]
        %v668 = vld [vmem:[#allocation2 + $0x70] sm:$0xff]
        %v669 = vld [vmem:[#allocation2 + $0x78] sm:$0xff]
        %v670 = vld [vmem:[#allocation2 + $0x80] sm:$0xff]
        %v671 = vld [vmem:[#allocation2 + $0x88] sm:$0xff]
        %v672 = vld [vmem:[#allocation2 + $0x90] sm:$0xff]
        %v673 = vld [vmem:[#allocation2 + $0x98] sm:$0xff]
        %v674 = vld [vmem:[#allocation2 + $0xa0] sm:$0xff]
        %v675 = vld [vmem:[#allocation2 + $0xa8] sm:$0xff]
        %v676 = vld [vmem:[#allocation2 + $0xb0] sm:$0xff]
        %v677 = vld [vmem:[#allocation2 + $0xb8] sm:$0xff]
        %v678 = vld [vmem:[#allocation2 + $0xc0] sm:$0xff]
        %v679 = vld [vmem:[#allocation2 + $0xc8] sm:$0xff]
        %v680 = vld [vmem:[#allocation2 + $0xd0] sm:$0xff]
        %v681 = vld [vmem:[#allocation2 + $0xd8] sm:$0xff]
        %v682 = vld [vmem:[#allocation2 + $0xe0] sm:$0xff]
        %v683 = vld [vmem:[#allocation2 + $0xe8] sm:$0xff]
        %v684 = vld [vmem:[#allocation2 + $0xf0] sm:$0xff]
        %v685 = vld [vmem:[#allocation2 + $0xf8] sm:$0xff]
        %v686 = vld [vmem:[%s2] sm:$0x1]
        %v688 = vlaneseq
        %v689 = vshrl.u32 %v688, 7
        %v690 = vsub.s32 0, %v689
        %v691 = vrot.slane %v686, %v690
        %v693 = vadd.f32 %v654, %v691
        %v694 = vadd.f32 %v655, %v691
        %v695 = vadd.f32 %v656, %v691
        %v696 = vadd.f32 %v657, %v691
        %v697 = vadd.f32 %v658, %v691
        %v698 = vadd.f32 %v659, %v691
        %v699 = vadd.f32 %v660, %v691
        %v700 = vadd.f32 %v661, %v691
        %v701 = vadd.f32 %v662, %v691
        %v702 = vadd.f32 %v663, %v691
        %v703 = vadd.f32 %v664, %v691
        %v704 = vadd.f32 %v665, %v691
        %v705 = vadd.f32 %v666, %v691
        %v706 = vadd.f32 %v667, %v691
        %v707 = vadd.f32 %v668, %v691
        %v708 = vadd.f32 %v669, %v691
        %v709 = vadd.f32 %v670, %v691
        %v710 = vadd.f32 %v671, %v691
        %v711 = vadd.f32 %v672, %v691
        %v712 = vadd.f32 %v673, %v691
        %v713 = vadd.f32 %v674, %v691
        %v714 = vadd.f32 %v675, %v691
        %v715 = vadd.f32 %v676, %v691
        %v716 = vadd.f32 %v677, %v691
        %v717 = vadd.f32 %v678, %v691
        %v718 = vadd.f32 %v679, %v691
        %v719 = vadd.f32 %v680, %v691
        %v720 = vadd.f32 %v681, %v691
        %v721 = vadd.f32 %v682, %v691
        %v722 = vadd.f32 %v683, %v691
        %v723 = vadd.f32 %v684, %v691
        %v724 = vadd.f32 %v685, %v691
        %vm725 = vcmp.ge.f32.partialorder %v693, 0.0
        %vm726 = vcmp.ge.f32.partialorder %v694, 0.0
        %vm727 = vcmp.ge.f32.partialorder %v695, 0.0
        %vm728 = vcmp.ge.f32.partialorder %v696, 0.0
        %vm729 = vcmp.ge.f32.partialorder %v697, 0.0
        %vm730 = vcmp.ge.f32.partialorder %v698, 0.0
        %vm731 = vcmp.ge.f32.partialorder %v699, 0.0
        %vm732 = vcmp.ge.f32.partialorder %v700, 0.0
        %vm733 = vcmp.ge.f32.partialorder %v701, 0.0
        %vm734 = vcmp.ge.f32.partialorder %v702, 0.0
        %vm735 = vcmp.ge.f32.partialorder %v703, 0.0
        %vm736 = vcmp.ge.f32.partialorder %v704, 0.0
        %vm737 = vcmp.ge.f32.partialorder %v705, 0.0
        %vm738 = vcmp.ge.f32.partialorder %v706, 0.0
        %vm739 = vcmp.ge.f32.partialorder %v707, 0.0
        %vm740 = vcmp.ge.f32.partialorder %v708, 0.0
        %vm741 = vcmp.ge.f32.partialorder %v709, 0.0
        %vm742 = vcmp.ge.f32.partialorder %v710, 0.0
        %vm743 = vcmp.ge.f32.partialorder %v711, 0.0
        %vm744 = vcmp.ge.f32.partialorder %v712, 0.0
        %vm745 = vcmp.ge.f32.partialorder %v713, 0.0
        %vm746 = vcmp.ge.f32.partialorder %v714, 0.0
        %vm747 = vcmp.ge.f32.partialorder %v715, 0.0
        %vm748 = vcmp.ge.f32.partialorder %v716, 0.0
        %vm749 = vcmp.ge.f32.partialorder %v717, 0.0
        %vm750 = vcmp.ge.f32.partialorder %v718, 0.0
        %vm751 = vcmp.ge.f32.partialorder %v719, 0.0
        %vm752 = vcmp.ge.f32.partialorder %v720, 0.0
        %vm753 = vcmp.ge.f32.partialorder %v721, 0.0
        %vm754 = vcmp.ge.f32.partialorder %v722, 0.0
        %vm755 = vcmp.ge.f32.partialorder %v723, 0.0
        %vm756 = vcmp.ge.f32.partialorder %v724, 0.0
        %v757 = vmul.f32 %v693, 0.1
        %v758 = vmul.f32 %v694, 0.1
        %v759 = vmul.f32 %v695, 0.1
        %v760 = vmul.f32 %v696, 0.1
        %v761 = vmul.f32 %v697, 0.1
        %v762 = vmul.f32 %v698, 0.1
        %v763 = vmul.f32 %v699, 0.1
        %v764 = vmul.f32 %v700, 0.1
        %v765 = vmul.f32 %v701, 0.1
        %v766 = vmul.f32 %v702, 0.1
        %v767 = vmul.f32 %v703, 0.1
        %v768 = vmul.f32 %v704, 0.1
        %v769 = vmul.f32 %v705, 0.1
        %v770 = vmul.f32 %v706, 0.1
        %v771 = vmul.f32 %v707, 0.1
        %v772 = vmul.f32 %v708, 0.1
        %v773 = vmul.f32 %v709, 0.1
        %v774 = vmul.f32 %v710, 0.1
        %v775 = vmul.f32 %v711, 0.1
        %v776 = vmul.f32 %v712, 0.1
        %v777 = vmul.f32 %v713, 0.1
        %v778 = vmul.f32 %v714, 0.1
        %v779 = vmul.f32 %v715, 0.1
        %v780 = vmul.f32 %v716, 0.1
        %v781 = vmul.f32 %v717, 0.1
        %v782 = vmul.f32 %v718, 0.1
        %v783 = vmul.f32 %v719, 0.1
        %v784 = vmul.f32 %v720, 0.1
        %v785 = vmul.f32 %v721, 0.1
        %v786 = vmul.f32 %v722, 0.1
        %v787 = vmul.f32 %v723, 0.1
        %v788 = vmul.f32 %v724, 0.1
        %v789 = vsel %vm725, %v693, %v757
        %v790 = vsel %vm726, %v694, %v758
        %v791 = vsel %vm727, %v695, %v759
        %v792 = vsel %vm728, %v696, %v760
        %v793 = vsel %vm729, %v697, %v761
        %v794 = vsel %vm730, %v698, %v762
        %v795 = vsel %vm731, %v699, %v763
        %v796 = vsel %vm732, %v700, %v764
        %v797 = vsel %vm733, %v701, %v765
        %v798 = vsel %vm734, %v702, %v766
        %v799 = vsel %vm735, %v703, %v767
        %v800 = vsel %vm736, %v704, %v768
        %v801 = vsel %vm737, %v705, %v769
        %v802 = vsel %vm738, %v706, %v770
        %v803 = vsel %vm739, %v707, %v771
        %v804 = vsel %vm740, %v708, %v772
        %v805 = vsel %vm741, %v709, %v773
        %v806 = vsel %vm742, %v710, %v774
        %v807 = vsel %vm743, %v711, %v775
        %v808 = vsel %vm744, %v712, %v776
        %v809 = vsel %vm745, %v713, %v777
        %v810 = vsel %vm746, %v714, %v778
        %v811 = vsel %vm747, %v715, %v779
        %v812 = vsel %vm748, %v716, %v780
        %v813 = vsel %vm749, %v717, %v781
        %v814 = vsel %vm750, %v718, %v782
        %v815 = vsel %vm751, %v719, %v783
        %v816 = vsel %vm752, %v720, %v784
        %v817 = vsel %vm753, %v721, %v785
        %v818 = vsel %vm754, %v722, %v786
        %v819 = vsel %vm755, %v723, %v787
        %v820 = vsel %vm756, %v724, %v788
        %v821 = vpack.c.bf16 %v790, %v789
        %v822 = vpack.c.bf16 %v792, %v791
        %v823 = vpack.c.bf16 %v794, %v793
        %v824 = vpack.c.bf16 %v796, %v795
        %v825 = vpack.c.bf16 %v798, %v797
        %v826 = vpack.c.bf16 %v800, %v799
        %v827 = vpack.c.bf16 %v802, %v801
        %v828 = vpack.c.bf16 %v804, %v803
        %v829 = vpack.c.bf16 %v806, %v805
        %v830 = vpack.c.bf16 %v808, %v807
        %v831 = vpack.c.bf16 %v810, %v809
        %v832 = vpack.c.bf16 %v812, %v811
        %v833 = vpack.c.bf16 %v814, %v813
        %v834 = vpack.c.bf16 %v816, %v815
        %v835 = vpack.c.bf16 %v818, %v817
        %v836 = vpack.c.bf16 %v820, %v819
        %v853 = vunpack.c.l.b16 %v821
        %v854 = vunpack.c.h.b16 %v821
        %v855 = vunpack.c.l.b16 %v822
        %v856 = vunpack.c.h.b16 %v822
        %v857 = vunpack.c.l.b16 %v823
        %v858 = vunpack.c.h.b16 %v823
        %v859 = vunpack.c.l.b16 %v824
        %v860 = vunpack.c.h.b16 %v824
        %v861 = vunpack.c.l.b16 %v825
        %v862 = vunpack.c.h.b16 %v825
        %v863 = vunpack.c.l.b16 %v826
        %v864 = vunpack.c.h.b16 %v826
        %v865 = vunpack.c.l.b16 %v827
        %v866 = vunpack.c.h.b16 %v827
        %v867 = vunpack.c.l.b16 %v828
        %v868 = vunpack.c.h.b16 %v828
        %v869 = vunpack.c.l.b16 %v829
        %v870 = vunpack.c.h.b16 %v829
        %v871 = vunpack.c.l.b16 %v830
        %v872 = vunpack.c.h.b16 %v830
        %v873 = vunpack.c.l.b16 %v831
        %v874 = vunpack.c.h.b16 %v831
        %v875 = vunpack.c.l.b16 %v832
        %v876 = vunpack.c.h.b16 %v832
        %v877 = vunpack.c.l.b16 %v833
        %v878 = vunpack.c.h.b16 %v833
        %v879 = vunpack.c.l.b16 %v834
        %v880 = vunpack.c.h.b16 %v834
        %v881 = vunpack.c.l.b16 %v835
        %v882 = vunpack.c.h.b16 %v835
        %v883 = vunpack.c.l.b16 %v836
        %v884 = vunpack.c.h.b16 %v836
        %v885 = vpack.c.b16 %v853, %v853
        %v886 = vpack.c.b16 %v854, %v854
        %v887 = vpack.c.b16 %v855, %v855
        %v888 = vpack.c.b16 %v856, %v856
        %v889 = vpack.c.b16 %v857, %v857
        %v890 = vpack.c.b16 %v858, %v858
        %v891 = vpack.c.b16 %v859, %v859
        %v892 = vpack.c.b16 %v860, %v860
        %v893 = vpack.c.b16 %v861, %v861
        %v894 = vpack.c.b16 %v862, %v862
        %v895 = vpack.c.b16 %v863, %v863
        %v896 = vpack.c.b16 %v864, %v864
        %v897 = vpack.c.b16 %v865, %v865
        %v898 = vpack.c.b16 %v866, %v866
        %v899 = vpack.c.b16 %v867, %v867
        %v900 = vpack.c.b16 %v868, %v868
        %v901 = vpack.c.b16 %v869, %v869
        %v902 = vpack.c.b16 %v870, %v870
        %v903 = vpack.c.b16 %v871, %v871
        %v904 = vpack.c.b16 %v872, %v872
        %v905 = vpack.c.b16 %v873, %v873
        %v906 = vpack.c.b16 %v874, %v874
        %v907 = vpack.c.b16 %v875, %v875
        %v908 = vpack.c.b16 %v876, %v876
        %v909 = vpack.c.b16 %v877, %v877
        %v910 = vpack.c.b16 %v878, %v878
        %v911 = vpack.c.b16 %v879, %v879
        %v912 = vpack.c.b16 %v880, %v880
        %v913 = vpack.c.b16 %v881, %v881
        %v914 = vpack.c.b16 %v882, %v882
        %v915 = vpack.c.b16 %v883, %v883
        %v916 = vpack.c.b16 %v884, %v884
        %949 = vst [vmem:[%s177] sm:$0xf] %v885
        %950 = vst [vmem:[%s177 + $0x4] sm:$0xf] %v886
        %951 = vst [vmem:[%s177 + $0x8] sm:$0xf] %v887
        %952 = vst [vmem:[%s177 + $0xc] sm:$0xf] %v888
        %953 = vst [vmem:[%s177 + $0x10] sm:$0xf] %v889
        %954 = vst [vmem:[%s177 + $0x14] sm:$0xf] %v890
        %955 = vst [vmem:[%s177 + $0x18] sm:$0xf] %v891
        %956 = vst [vmem:[%s177 + $0x1c] sm:$0xf] %v892
        %957 = vst [vmem:[%s177 + $0x20] sm:$0xf] %v893
        %958 = vst [vmem:[%s177 + $0x24] sm:$0xf] %v894
        %959 = vst [vmem:[%s177 + $0x28] sm:$0xf] %v895
        %960 = vst [vmem:[%s177 + $0x2c] sm:$0xf] %v896
        %961 = vst [vmem:[%s177 + $0x30] sm:$0xf] %v897
        %962 = vst [vmem:[%s177 + $0x34] sm:$0xf] %v898
        %963 = vst [vmem:[%s177 + $0x38] sm:$0xf] %v899
        %964 = vst [vmem:[%s177 + $0x3c] sm:$0xf] %v900
        %965 = vst [vmem:[%s177 + $0x40] sm:$0xf] %v901
        %966 = vst [vmem:[%s177 + $0x44] sm:$0xf] %v902
        %967 = vst [vmem:[%s177 + $0x48] sm:$0xf] %v903
        %968 = vst [vmem:[%s177 + $0x4c] sm:$0xf] %v904
        %969 = vst [vmem:[%s177 + $0x50] sm:$0xf] %v905
        %970 = vst [vmem:[%s177 + $0x54] sm:$0xf] %v906
        %971 = vst [vmem:[%s177 + $0x58] sm:$0xf] %v907
        %972 = vst [vmem:[%s177 + $0x5c] sm:$0xf] %v908
        %973 = vst [vmem:[%s177 + $0x60] sm:$0xf] %v909
        %974 = vst [vmem:[%s177 + $0x64] sm:$0xf] %v910
        %975 = vst [vmem:[%s177 + $0x68] sm:$0xf] %v911
        %976 = vst [vmem:[%s177 + $0x6c] sm:$0xf] %v912
        %977 = vst [vmem:[%s177 + $0x70] sm:$0xf] %v913
        %978 = vst [vmem:[%s177 + $0x74] sm:$0xf] %v914
        %979 = vst [vmem:[%s177 + $0x78] sm:$0xf] %v915
        %980 = vst [vmem:[%s177 + $0x7c] sm:$0xf] %v916
        %s981 = sand.u32 %s107, 1
        %s982 = scalar_lea.sflag [#allocation4], %s981
        %s983 = sand.u32 %s107, 1
        %s984 = smul.addr %s983, 128
        %s985 = scalar_lea.vmem [#allocation3], %s984
        // Predicated region
        $region33: #{tpu_custom_call.1} parent=31 // pred_check
          %p986 = pneg %p117
        $region34: #{tpu_custom_call.1} parent=31 // pred_check_branch
          %988 = sbr.rel (%p986) target = $region36
        $region35: #{tpu_custom_call.1} parent=31 // pred_region
          %s989 = smul.u32 32, %s22
          %s991 = ssub.s32 2048, 2048
          %992 = vsyncadd %s982, %s991
          %s993 = smul.addr %s21, 64
          %s994 = sadd.s32 %s989, %s993
          %s995 = smul.addr %s994, 64
          %s996 = scalar_lea.hbm %s3, %s995
          %s997 = sshll.u32 %s985, 4
          %s998 = int_to_ptr.vmem [resolvable:$true] %s997
          %1003 = dma.vmem_to_hbm [thread:$0]  %s998, 2048, %s996, %s982, 64, 64, 4
        $region36: #{tpu_custom_call.1} parent=31 // pred_fallthru
          _
      $region32: #{tpu_custom_call.1} parent=5 // pred_fallthru
        _
      %p1004 = scmp.le.s32.totalorder 2, %s12
      // Predicated region
      $region37: #{tpu_custom_call.1} parent=5 // pred_check
        %p1005 = pneg %p1004
      $region38: #{tpu_custom_call.1} parent=5 // pred_check_branch
        %1007 = sbr.rel (%p1005) target = $region40
      $region39: #{tpu_custom_call.1} parent=5 // pred_region
        %s1008 = ssub.s32 %s12, 2
        // Predicated region
        $region41: #{tpu_custom_call.1} parent=39 // pred_check
          %p1009 = pneg %p123
        $region42: #{tpu_custom_call.1} parent=39 // pred_check_branch
          %1011 = sbr.rel (%p1009) target = $region44
        $region43: #{tpu_custom_call.1} parent=39 // pred_region
          %s1012 = sand.u32 %s108, 1
          %s1013 = scalar_lea.sflag [#allocation4], %s1012
          %s1014 = sand.u32 %s108, 1
          %s1015 = smul.addr %s1014, 128
          %s1016 = scalar_lea.vmem [#allocation3], %s1015
          %1017 = dma.done %s1013, 2048
        $region44: #{tpu_custom_call.1} parent=39 // pred_fallthru
          _
      $region40: #{tpu_custom_call.1} parent=5 // pred_fallthru
        _
    $region6: #{tpu_custom_call.1} parent=1 // loop_footer
      %s16 = sadd.s32 1, %s12
    $region7: #{tpu_custom_call.1} parent=1 // loop_footer_branch
      %11 = sbr.rel target = $region3
    $region8: #{tpu_custom_call.1} parent=1 // loop_exit
      _
    %1018 = vsyncpa [#allocation4], 1
    %s1019 = scalar_lea.sflag [#allocation4], 1
    %1020 = vsyncpa %s1019, 1

// kernel: tpu_custom_call.1
$region0: #{tpu_custom_call.1}
  #allocation0 [shape = 'u32[]', space=smem, size = 0x4, offset = 0x4, fixed_abs, tag = 'smem constant byte address 0x4 - core index']
  #allocation1 [shape = 'u32[144,128]{1,0:T(1,128)}', space=vmem, size = 0x12000, scoped, tag = 'internal scratch']
  #allocation2 [shape = 'f32[256,128]{1,0:T(8,128)}', space=vmem, size = 0x20000, scoped, tag = 'scratch operand']
  %s0 = inlined_call_operand.vmem [shape: bf16[2,512,15], index: 0, kind: input, shape index: {}]
  %s1 = inlined_call_operand.vmem [shape: bf16[1,15,128], index: 1, kind: input, shape index: {}]
  %s2 = inlined_call_operand.vmem [shape: f32[1,128], index: 2, kind: input, shape index: {}]
  %s3 = inlined_call_operand.hbm [shape: bf16[2,512,128], index: 3, kind: output, shape index: {}]
  %s4 = sld [smem:[#allocation0]]
  $region45: #{tpu_custom_call.1} parent=0
    _
  %s6 = ssub.s32 1, %s4
  %s7 = scalar_select 0, %s6, %s4
  $region1: #{tpu_custom_call.1} parent=0
    #allocation3 [shape = 'u8[131072]{0}', space=vmem, size = 0x20000, scoped, tag = 'output window, operand 0']
    #allocation4 [shape = 's32[2]{0}', space=sflag, size = 0x8, scoped, tag = 'scoped memory for tpu_custom_call.1']
    %8 = vsyncpa [#allocation4], 0
    %s9 = scalar_lea.sflag [#allocation4], 1
    %10 = vsyncpa %s9, 0
    loop: start=0, step=1, limit=6
    $region2: #{tpu_custom_call.1} parent=1 // loop_pre_header
      _
    $region3: #{tpu_custom_call.1} parent=1 // loop_header
      %s12 = sphi 0, %s16
      %p13 = scmp.ge.s32.totalorder %s12, 6
      %s19 = sphi 0, %s31
      %s20 = sphi 0, %s27
      %s21 = sphi 0, %s19
      %s22 = sphi 0, %s20
      %s23 = sphi 0, %s21
      %s24 = sphi 0, %s22
      %s34 = sphi 0, %s36
      %s37 = sphi 0, %s34
      %s38 = sphi 0, %s37
      %s54 = sphi 0, %s38
      %s58 = sphi 0, %s58
      %s60 = sphi 0, %s58
      %s61 = sphi 0, %s60
      %s75 = sphi 0, %s61
      %s79 = sphi 0, %s79
      %s81 = sphi 0, %s79
      %s82 = sphi 0, %s81
      %s96 = sphi 0, %s82
      %s104 = sphi 0, %s106
      %s107 = sphi 0, %s104
      %s108 = sphi 0, %s107
      %s124 = sphi 0, %s108
    $region4: #{tpu_custom_call.1} parent=1 // loop_header_branch
      %15 = sbr.rel (%p13) target = $region8
    $region5: #{tpu_custom_call.1} parent=1 // loop_body
      %s17 = ssub.s32 %s12, 1
      %s18 = ssub.s32 %s12, 2
      %s25 = sadd.s32 1, %s20
      %p26 = scmp.ge.s32.totalorder %s25, 2
      %s27 = scalar_select %p26, 0, %s25
      %s28 = sadd.s32 1, %s19
      %s29 = scalar_select %p26, %s28, %s19
      %p30 = scmp.ge.s32.totalorder %s29, 2
      %s31 = scalar_select %p30, 0, %s29
      %s32 = ssub.s32 %s19, %s31
      %p33 = scmp.eq.s32.totalorder %s32, 0
      %s35 = sadd.s32 %s34, 1
      %s36 = scalar_select %p33, %s34, %s35
      %p39 = pneg %p33
      %p40 = scmp.eq.s32.totalorder %s12, 3
      %p41 = por %p39, %p40
      %p42 = scmp.ne.s32.totalorder %s34, %s37
      %p43 = scmp.eq.s32.totalorder %s12, 0
      %p44 = por %p42, %p43
      %p45 = scmp.ne.s32.totalorder %s34, %s37
      %p46 = scmp.eq.s32.totalorder %s17, 3
      %p47 = por %p45, %p46
      %p48 = scmp.ne.s32.totalorder %s37, %s38
      %p49 = scmp.eq.s32.totalorder %s17, 0
      %p50 = por %p48, %p49
      %p51 = scmp.ne.s32.totalorder %s37, %s38
      %p52 = scmp.eq.s32.totalorder %s18, 3
      %p53 = por %p51, %p52
      %p55 = scmp.ne.s32.totalorder %s38, %s54
      %p56 = scmp.eq.s32.totalorder %s18, 0
      %p57 = por %p55, %p56
      %s59 = sadd.s32 %s58, 1
      %p62 = scmp.eq.s32.totalorder %s12, 3
      %p63 = scmp.ne.s32.totalorder %s58, %s60
      %p64 = scmp.eq.s32.totalorder %s12, 0
      %p65 = por %p63, %p64
      %p66 = scmp.ne.s32.totalorder %s58, %s60
      %p67 = scmp.eq.s32.totalorder %s17, 3
      %p68 = por %p66, %p67
      %p69 = scmp.ne.s32.totalorder %s60, %s61
      %p70 = scmp.eq.s32.totalorder %s17, 0
      %p71 = por %p69, %p70
      %p72 = scmp.ne.s32.totalorder %s60, %s61
      %p73 = scmp.eq.s32.totalorder %s18, 3
      %p74 = por %p72, %p73
      %p76 = scmp.ne.s32.totalorder %s61, %s75
      %p77 = scmp.eq.s32.totalorder %s18, 0
      %p78 = por %p76, %p77
      %s80 = sadd.s32 %s79, 1
      %p83 = scmp.eq.s32.totalorder %s12, 3
      %p84 = scmp.ne.s32.totalorder %s79, %s81
      %p85 = scmp.eq.s32.totalorder %s12, 0
      %p86 = por %p84, %p85
      %p87 = scmp.ne.s32.totalorder %s79, %s81
      %p88 = scmp.eq.s32.totalorder %s17, 3
      %p89 = por %p87, %p88
      %p90 = scmp.ne.s32.totalorder %s81, %s82
      %p91 = scmp.eq.s32.totalorder %s17, 0
      %p92 = por %p90, %p91
      %p93 = scmp.ne.s32.totalorder %s81, %s82
      %p94 = scmp.eq.s32.totalorder %s18, 3
      %p95 = por %p93, %p94
      %p97 = scmp.ne.s32.totalorder %s82, %s96
      %p98 = scmp.eq.s32.totalorder %s18, 0
      %p99 = por %p97, %p98
      %s100 = ssub.s32 %s19, %s31
      %s101 = ssub.s32 %s20, %s27
      %s102 = sor.u32 %s100, %s101
      %p103 = scmp.eq.s32.totalorder %s102, 0
      %s105 = sadd.s32 %s104, 1
      %s106 = scalar_select %p103, %s104, %s105
      %p109 = pneg %p103
      %p110 = scmp.eq.s32.totalorder %s12, 3
      %p111 = por %p109, %p110
      %p112 = scmp.ne.s32.totalorder %s104, %s107
      %p113 = scmp.eq.s32.totalorder %s12, 0
      %p114 = por %p112, %p113
      %p115 = scmp.ne.s32.totalorder %s104, %s107
      %p116 = scmp.eq.s32.totalorder %s17, 3
      %p117 = por %p115, %p116
      %p118 = scmp.ne.s32.totalorder %s107, %s108
      %p119 = scmp.eq.s32.totalorder %s17, 0
      %p120 = por %p118, %p119
      %p121 = scmp.ne.s32.totalorder %s107, %s108
      %p122 = scmp.eq.s32.totalorder %s18, 3
      %p123 = por %p121, %p122
      %p125 = scmp.ne.s32.totalorder %s108, %s124
      %p126 = scmp.eq.s32.totalorder %s18, 0
      %p127 = por %p125, %p126
      %p128 = scmp.le.s32.totalorder 1, %s12
      %p129 = scmp.lt.s32.totalorder %s12, 5
      %p130 = pnand %p128, %p129
      %p131 = pneg %p130
      // Predicated region
      $region9: #{tpu_custom_call.1} parent=5 // pred_check
        _
      $region10: #{tpu_custom_call.1} parent=5 // pred_check_branch
        %133 = sbr.rel (%p130) target = $region12
      $region11: #{tpu_custom_call.1} parent=5 // pred_region
        %s134 = ssub.s32 %s12, 1
        // Predicated region
        $region13: #{tpu_custom_call.1} parent=11 // pred_check
          %p135 = pneg %p71
        $region14: #{tpu_custom_call.1} parent=11 // pred_check_branch
          %137 = sbr.rel (%p135) target = $region16
        $region15: #{tpu_custom_call.1} parent=11 // pred_region
          _
        $region16: #{tpu_custom_call.1} parent=11 // pred_fallthru
          _
        // Predicated region
        $region17: #{tpu_custom_call.1} parent=11 // pred_check
          %p138 = pneg %p92
        $region18: #{tpu_custom_call.1} parent=11 // pred_check_branch
          %140 = sbr.rel (%p138) target = $region20
        $region19: #{tpu_custom_call.1} parent=11 // pred_region
          _
        $region20: #{tpu_custom_call.1} parent=11 // pred_fallthru
          _
      $region12: #{tpu_custom_call.1} parent=5 // pred_fallthru
        _
      %p141 = scmp.lt.s32.totalorder %s12, 4
      // Predicated region
      $region21: #{tpu_custom_call.1} parent=5 // pred_check
        %p142 = pneg %p141
      $region22: #{tpu_custom_call.1} parent=5 // pred_check_branch
        %144 = sbr.rel (%p142) target = $region24
      $region23: #{tpu_custom_call.1} parent=5 // pred_region
        // Predicated region
        $region25: #{tpu_custom_call.1} parent=23 // pred_check
          %p145 = pneg %p44
        $region26: #{tpu_custom_call.1} parent=23 // pred_check_branch
          %147 = sbr.rel (%p145) target = $region28
        $region27: #{tpu_custom_call.1} parent=23 // pred_region
          %p148 = scmp.lt.s32.totalorder %s19, 1
          %s149 = scalar_select %p148, %s19, 1
          %s150 = smul.addr %s149, 64
          %s151 = smul.addr %s150, 4
          %s152 = scalar_lea.vmem %s0, %s151
        $region28: #{tpu_custom_call.1} parent=23 // pred_fallthru
          _
      $region24: #{tpu_custom_call.1} parent=5 // pred_fallthru
        _
      %p153 = scmp.le.s32.totalorder 1, %s12
      %p154 = scmp.lt.s32.totalorder %s12, 5
      %p155 = pnand %p153, %p154
      %p156 = pneg %p155
      // Predicated region
      $region29: #{tpu_custom_call.1} parent=5 // pred_check
        _
      $region30: #{tpu_custom_call.1} parent=5 // pred_check_branch
        %158 = sbr.rel (%p155) target = $region32
      $region31: #{tpu_custom_call.1} parent=5 // pred_region
        %s159 = ssub.s32 %s12, 1
        %p160 = scmp.lt.s32.totalorder %s21, 1
        %s161 = scalar_select %p160, %s21, 1
        %s162 = smul.addr %s161, 64
        %s163 = smul.addr %s162, 4
        %s164 = scalar_lea.vmem %s0, %s163
        %p165 = pneg %p50
        %p166 = pneg %p47
        %p167 = pneg %p71
        %p168 = pneg %p68
        %p169 = pneg %p92
        %p170 = pneg %p89
        %p171 = pneg %p120
        %p172 = pneg %p117
        %s173 = sand.u32 %s107, 1
        %s174 = scalar_lea.sflag [#allocation4], %s173
        %s175 = sand.u32 %s107, 1
        %s176 = smul.addr %s175, 128
        %s177 = scalar_lea.vmem [#allocation3], %s176
        %p178 = scmp.lt.s32.totalorder %s21, 1
        %s179 = scalar_select %p178, %s21, 1
        %s180 = smul.addr %s179, 64
        %s181 = smul.addr %s180, 4
        %s182 = scalar_lea.vmem %s0, %s181
        %s183 = smul.u32 32, %s22
        %s185 = smul.u32 %s22, 256
        %186 = vst [vmem:[#allocation2] sm:$0xff] 0.0
        %187 = vst [vmem:[#allocation2 + $0x8] sm:$0xff] 0.0
        %188 = vst [vmem:[#allocation2 + $0x10] sm:$0xff] 0.0
        %189 = vst [vmem:[#allocation2 + $0x18] sm:$0xff] 0.0
        %190 = vst [vmem:[#allocation2 + $0x20] sm:$0xff] 0.0
        %191 = vst [vmem:[#allocation2 + $0x28] sm:$0xff] 0.0
        %192 = vst [vmem:[#allocation2 + $0x30] sm:$0xff] 0.0
        %193 = vst [vmem:[#allocation2 + $0x38] sm:$0xff] 0.0
        %194 = vst [vmem:[#allocation2 + $0x40] sm:$0xff] 0.0
        %195 = vst [vmem:[#allocation2 + $0x48] sm:$0xff] 0.0
        %196 = vst [vmem:[#allocation2 + $0x50] sm:$0xff] 0.0
        %197 = vst [vmem:[#allocation2 + $0x58] sm:$0xff] 0.0
        %198 = vst [vmem:[#allocation2 + $0x60] sm:$0xff] 0.0
        %199 = vst [vmem:[#allocation2 + $0x68] sm:$0xff] 0.0
        %200 = vst [vmem:[#allocation2 + $0x70] sm:$0xff] 0.0
        %201 = vst [vmem:[#allocation2 + $0x78] sm:$0xff] 0.0
        %202 = vst [vmem:[#allocation2 + $0x80] sm:$0xff] 0.0
        %203 = vst [vmem:[#allocation2 + $0x88] sm:$0xff] 0.0
        %204 = vst [vmem:[#allocation2 + $0x90] sm:$0xff] 0.0
        %205 = vst [vmem:[#allocation2 + $0x98] sm:$0xff] 0.0
        %206 = vst [vmem:[#allocation2 + $0xa0] sm:$0xff] 0.0
        %207 = vst [vmem:[#allocation2 + $0xa8] sm:$0xff] 0.0
        %208 = vst [vmem:[#allocation2 + $0xb0] sm:$0xff] 0.0
        %209 = vst [vmem:[#allocation2 + $0xb8] sm:$0xff] 0.0
        %210 = vst [vmem:[#allocation2 + $0xc0] sm:$0xff] 0.0
        %211 = vst [vmem:[#allocation2 + $0xc8] sm:$0xff] 0.0
        %212 = vst [vmem:[#allocation2 + $0xd0] sm:$0xff] 0.0
        %213 = vst [vmem:[#allocation2 + $0xd8] sm:$0xff] 0.0
        %214 = vst [vmem:[#allocation2 + $0xe0] sm:$0xff] 0.0
        %215 = vst [vmem:[#allocation2 + $0xe8] sm:$0xff] 0.0
        %216 = vst [vmem:[#allocation2 + $0xf0] sm:$0xff] 0.0
        %217 = vst [vmem:[#allocation2 + $0xf8] sm:$0xff] 0.0
        %s218 = sshra.s32 %s185, 3
        %s219 = sand.u32 %s185, 7
        %s220 = smul.addr %s218, 4
        %s221 = scalar_lea.vmem %s182, %s220
        %v222 = vld [vmem:[%s221] sm:$0xf]
        %v223 = vld [vmem:[%s221 + $0x4] sm:$0xf]
        %v224 = vld [vmem:[%s221 + $0x8] sm:$0xf]
        %v225 = vld [vmem:[%s221 + $0xc] sm:$0xf]
        %v226 = vld [vmem:[%s221 + $0x10] sm:$0xf]
        %v227 = vld [vmem:[%s221 + $0x14] sm:$0xf]
        %v228 = vld [vmem:[%s221 + $0x18] sm:$0xf]
        %v229 = vld [vmem:[%s221 + $0x1c] sm:$0xf]
        %v230 = vld [vmem:[%s221 + $0x20] sm:$0xf]
        %v231 = vld [vmem:[%s221 + $0x24] sm:$0xf]
        %v232 = vld [vmem:[%s221 + $0x28] sm:$0xf]
        %v233 = vld [vmem:[%s221 + $0x2c] sm:$0xf]
        %v234 = vld [vmem:[%s221 + $0x30] sm:$0xf]
        %v235 = vld [vmem:[%s221 + $0x34] sm:$0xf]
        %v236 = vld [vmem:[%s221 + $0x38] sm:$0xf]
        %v237 = vld [vmem:[%s221 + $0x3c] sm:$0xf]
        %v238 = vld [vmem:[%s221 + $0x40] sm:$0xf]
        %v239 = vld [vmem:[%s221 + $0x44] sm:$0xf]
        %v240 = vld [vmem:[%s221 + $0x48] sm:$0xf]
        %v241 = vld [vmem:[%s221 + $0x4c] sm:$0xf]
        %v242 = vld [vmem:[%s221 + $0x50] sm:$0xf]
        %v243 = vld [vmem:[%s221 + $0x54] sm:$0xf]
        %v244 = vld [vmem:[%s221 + $0x58] sm:$0xf]
        %v245 = vld [vmem:[%s221 + $0x5c] sm:$0xf]
        %v246 = vld [vmem:[%s221 + $0x60] sm:$0xf]
        %v247 = vld [vmem:[%s221 + $0x64] sm:$0xf]
        %v248 = vld [vmem:[%s221 + $0x68] sm:$0xf]
        %v249 = vld [vmem:[%s221 + $0x6c] sm:$0xf]
        %v250 = vld [vmem:[%s221 + $0x70] sm:$0xf]
        %v251 = vld [vmem:[%s221 + $0x74] sm:$0xf]
        %v252 = vld [vmem:[%s221 + $0x78] sm:$0xf]
        %v253 = vld [vmem:[%s221 + $0x7c] sm:$0xf]
        %v254 = vld [vmem:[%s1] sm:$0xf]
        %v255 = vld [vmem:[%s1 + $0x4] sm:$0xf]
        %v256 = vld [vmem:[#allocation2] sm:$0xff]
        %v257 = vld [vmem:[#allocation2 + $0x8] sm:$0xff]
        %v258 = vld [vmem:[#allocation2 + $0x10] sm:$0xff]
        %v259 = vld [vmem:[#allocation2 + $0x18] sm:$0xff]
        %v260 = vld [vmem:[#allocation2 + $0x20] sm:$0xff]
        %v261 = vld [vmem:[#allocation2 + $0x28] sm:$0xff]
        %v262 = vld [vmem:[#allocation2 + $0x30] sm:$0xff]
        %v263 = vld [vmem:[#allocation2 + $0x38] sm:$0xff]
        %v264 = vld [vmem:[#allocation2 + $0x40] sm:$0xff]
        %v265 = vld [vmem:[#allocation2 + $0x48] sm:$0xff]
        %v266 = vld [vmem:[#allocation2 + $0x50] sm:$0xff]
        %v267 = vld [vmem:[#allocation2 + $0x58] sm:$0xff]
        %v268 = vld [vmem:[#allocation2 + $0x60] sm:$0xff]
        %v269 = vld [vmem:[#allocation2 + $0x68] sm:$0xff]
        %v270 = vld [vmem:[#allocation2 + $0x70] sm:$0xff]
        %v271 = vld [vmem:[#allocation2 + $0x78] sm:$0xff]
        %v272 = vld [vmem:[#allocation2 + $0x80] sm:$0xff]
        %v273 = vld [vmem:[#allocation2 + $0x88] sm:$0xff]
        %v274 = vld [vmem:[#allocation2 + $0x90] sm:$0xff]
        %v275 = vld [vmem:[#allocation2 + $0x98] sm:$0xff]
        %v276 = vld [vmem:[#allocation2 + $0xa0] sm:$0xff]
        %v277 = vld [vmem:[#allocation2 + $0xa8] sm:$0xff]
        %v278 = vld [vmem:[#allocation2 + $0xb0] sm:$0xff]
        %v279 = vld [vmem:[#allocation2 + $0xb8] sm:$0xff]
        %v280 = vld [vmem:[#allocation2 + $0xc0] sm:$0xff]
        %v281 = vld [vmem:[#allocation2 + $0xc8] sm:$0xff]
        %v282 = vld [vmem:[#allocation2 + $0xd0] sm:$0xff]
        %v283 = vld [vmem:[#allocation2 + $0xd8] sm:$0xff]
        %v284 = vld [vmem:[#allocation2 + $0xe0] sm:$0xff]
        %v285 = vld [vmem:[#allocation2 + $0xe8] sm:$0xff]
        %v286 = vld [vmem:[#allocation2 + $0xf0] sm:$0xff]
        %v287 = vld [vmem:[#allocation2 + $0xf8] sm:$0xff]
        %v320 = vunpack.c.l.b16 %v222
        %v321 = vunpack.c.l.b16 %v223
        %v322 = vunpack.c.l.b16 %v224
        %v323 = vunpack.c.l.b16 %v225
        %v324 = vunpack.c.l.b16 %v226
        %v325 = vunpack.c.l.b16 %v227
        %v326 = vunpack.c.l.b16 %v228
        %v327 = vunpack.c.l.b16 %v229
        %v328 = vunpack.c.l.b16 %v230
        %v329 = vunpack.c.l.b16 %v231
        %v330 = vunpack.c.l.b16 %v232
        %v331 = vunpack.c.l.b16 %v233
        %v332 = vunpack.c.l.b16 %v234
        %v333 = vunpack.c.l.b16 %v235
        %v334 = vunpack.c.l.b16 %v236
        %v335 = vunpack.c.l.b16 %v237
        %v336 = vunpack.c.l.b16 %v238
        %v337 = vunpack.c.l.b16 %v239
        %v338 = vunpack.c.l.b16 %v240
        %v339 = vunpack.c.l.b16 %v241
        %v340 = vunpack.c.l.b16 %v242
        %v341 = vunpack.c.l.b16 %v243
        %v342 = vunpack.c.l.b16 %v244
        %v343 = vunpack.c.l.b16 %v245
        %v344 = vunpack.c.l.b16 %v246
        %v345 = vunpack.c.l.b16 %v247
        %v346 = vunpack.c.l.b16 %v248
        %v347 = vunpack.c.l.b16 %v249
        %v348 = vunpack.c.l.b16 %v250
        %v349 = vunpack.c.l.b16 %v251
        %v350 = vunpack.c.l.b16 %v252
        %v351 = vunpack.c.l.b16 %v253
        %v352 = vpack.c.b16 %v321, %v320
        %v353 = vpack.c.b16 %v323, %v322
        %v354 = vpack.c.b16 %v325, %v324
        %v355 = vpack.c.b16 %v327, %v326
        %v356 = vpack.c.b16 %v329, %v328
        %v357 = vpack.c.b16 %v331, %v330
        %v358 = vpack.c.b16 %v333, %v332
        %v359 = vpack.c.b16 %v335, %v334
        %v360 = vpack.c.b16 %v337, %v336
        %v361 = vpack.c.b16 %v339, %v338
        %v362 = vpack.c.b16 %v341, %v340
        %v363 = vpack.c.b16 %v343, %v342
        %v364 = vpack.c.b16 %v345, %v344
        %v365 = vpack.c.b16 %v347, %v346
        %v366 = vpack.c.b16 %v349, %v348
        %v367 = vpack.c.b16 %v351, %v350
        %v370 = vunpack.c.l.b16 %v254
        %v371 = vunpack.c.l.b16 %v255
        %v372 = vpack.c.b16 %v371, %v370
        %vm373 = vcmask 121856
        %v375 = vsel %vm373, %v352, 0
        %v378 = vsel %vm373, %v353, 0
        %v381 = vsel %vm373, %v354, 0
        %v384 = vsel %vm373, %v355, 0
        %v387 = vsel %vm373, %v356, 0
        %v390 = vsel %vm373, %v357, 0
        %v393 = vsel %vm373, %v358, 0
        %v396 = vsel %vm373, %v359, 0
        %v399 = vsel %vm373, %v360, 0
        %v402 = vsel %vm373, %v361, 0
        %v405 = vsel %vm373, %v362, 0
        %v408 = vsel %vm373, %v363, 0
        %v411 = vsel %vm373, %v364, 0
        %v414 = vsel %vm373, %v365, 0
        %v417 = vsel %vm373, %v366, 0
        %v420 = vsel %vm373, %v367, 0
        %vm422 = vcmask 1046528
        %vm423 = vcmask 1047552
        %v424 = vsel %vm422, 4294967295, 65535
        %v425 = vsel %vm423, %v424, 0
        %v427 = vand.u32 %v372, %v425
        %429 = vmatprep.subr.bf16.mxu0 0
        %430 = vmatpush1.bf16.msra.mxu0 0
        %431 = vmatprep.subr.bf16.mxu0 0
        %432 = vmatpush1.bf16.msra.mxu0 0
        %433 = vmatprep.subr.bf16.mxu0 0
        %434 = vmatpush1.bf16.msra.mxu0 0
        %435 = vmatprep.subr.bf16.mxu0 0
        %436 = vmatpush1.bf16.msra.mxu0 0
        %437 = vmatprep.subr.bf16.mxu0 0
        %438 = vmatpush1.bf16.msra.mxu0 0
        %439 = vmatprep.subr.bf16.mxu0 0
        %440 = vmatpush1.bf16.msra.mxu0 0
        %441 = vmatprep.subr.bf16.mxu0 0
        %442 = vmatpush1.bf16.msra.mxu0 0
        %443 = vmatprep.subr.bf16.mxu0 0
        %444 = vmatpush1.bf16.msra.mxu0 %v427
        %445 = vmatprep.subr.bf16.mxu0 0
        %446 = vmatpush2.bf16.msra.mxu0 0
        %447 = vmatprep.subr.bf16.mxu0 0
        %448 = vmatpush2.bf16.msra.mxu0 0
        %449 = vmatprep.subr.bf16.mxu0 0
        %450 = vmatpush2.bf16.msra.mxu0 0
        %451 = vmatprep.subr.bf16.mxu0 0
        %452 = vmatpush2.bf16.msra.mxu0 0
        %453 = vmatprep.subr.bf16.mxu0 0
        %454 = vmatpush2.bf16.msra.mxu0 0
        %455 = vmatprep.subr.bf16.mxu0 0
        %456 = vmatpush2.bf16.msra.mxu0 0
        %457 = vmatprep.subr.bf16.mxu0 0
        %458 = vmatpush2.bf16.msra.mxu0 0
        %459 = vmatprep.subr.bf16.mxu0 0
        %460 = vmatpush2.bf16.msra.mxu0 0
        %461 = vmatprep.mubr.bf16.mxu0 0
        %462 = vmatmul.mubr.bf16.gmra.mxu0 %v375
        %v463 = vpop.f32.mrf.mxu0
        %v464 = vadd.f32 0.0, %v463
        %v465 = vpop.f32.mrf.mxu0
        %v466 = vpop.f32.mrf.mxu0
        %v467 = vadd.f32 0.0, %v466
        %v468 = vpop.f32.mrf.mxu0
        %469 = vmatprep.mubr.bf16.mxu0 0
        %470 = vmatmul.mubr.bf16.gmra.mxu0 %v378
        %v471 = vpop.f32.mrf.mxu0
        %v472 = vadd.f32 0.0, %v471
        %v473 = vpop.f32.mrf.mxu0
        %v474 = vpop.f32.mrf.mxu0
        %v475 = vadd.f32 0.0, %v474
        %v476 = vpop.f32.mrf.mxu0
        %477 = vmatprep.mubr.bf16.mxu0 0
        %478 = vmatmul.mubr.bf16.gmra.mxu0 %v381
        %v479 = vpop.f32.mrf.mxu0
        %v480 = vadd.f32 0.0, %v479
        %v481 = vpop.f32.mrf.mxu0
        %v482 = vpop.f32.mrf.mxu0
        %v483 = vadd.f32 0.0, %v482
        %v484 = vpop.f32.mrf.mxu0
        %485 = vmatprep.mubr.bf16.mxu0 0
        %486 = vmatmul.mubr.bf16.gmra.mxu0 %v384
        %v487 = vpop.f32.mrf.mxu0
        %v488 = vadd.f32 0.0, %v487
        %v489 = vpop.f32.mrf.mxu0
        %v490 = vpop.f32.mrf.mxu0
        %v491 = vadd.f32 0.0, %v490
        %v492 = vpop.f32.mrf.mxu0
        %493 = vmatprep.mubr.bf16.mxu0 0
        %494 = vmatmul.mubr.bf16.gmra.mxu0 %v387
        %v495 = vpop.f32.mrf.mxu0
        %v496 = vadd.f32 0.0, %v495
        %v497 = vpop.f32.mrf.mxu0
        %v498 = vpop.f32.mrf.mxu0
        %v499 = vadd.f32 0.0, %v498
        %v500 = vpop.f32.mrf.mxu0
        %501 = vmatprep.mubr.bf16.mxu0 0
        %502 = vmatmul.mubr.bf16.gmra.mxu0 %v390
        %v503 = vpop.f32.mrf.mxu0
        %v504 = vadd.f32 0.0, %v503
        %v505 = vpop.f32.mrf.mxu0
        %v506 = vpop.f32.mrf.mxu0
        %v507 = vadd.f32 0.0, %v506
        %v508 = vpop.f32.mrf.mxu0
        %509 = vmatprep.mubr.bf16.mxu0 0
        %510 = vmatmul.mubr.bf16.gmra.mxu0 %v393
        %v511 = vpop.f32.mrf.mxu0
        %v512 = vadd.f32 0.0, %v511
        %v513 = vpop.f32.mrf.mxu0
        %v514 = vpop.f32.mrf.mxu0
        %v515 = vadd.f32 0.0, %v514
        %v516 = vpop.f32.mrf.mxu0
        %517 = vmatprep.mubr.bf16.mxu0 0
        %518 = vmatmul.mubr.bf16.gmra.mxu0 %v396
        %v519 = vpop.f32.mrf.mxu0
        %v520 = vadd.f32 0.0, %v519
        %v521 = vpop.f32.mrf.mxu0
        %v522 = vpop.f32.mrf.mxu0
        %v523 = vadd.f32 0.0, %v522
        %v524 = vpop.f32.mrf.mxu0
        %525 = vmatprep.mubr.bf16.mxu0 0
        %526 = vmatmul.mubr.bf16.gmra.mxu0 %v399
        %v527 = vpop.f32.mrf.mxu0
        %v528 = vadd.f32 0.0, %v527
        %v529 = vpop.f32.mrf.mxu0
        %v530 = vpop.f32.mrf.mxu0
        %v531 = vadd.f32 0.0, %v530
        %v532 = vpop.f32.mrf.mxu0
        %533 = vmatprep.mubr.bf16.mxu0 0
        %534 = vmatmul.mubr.bf16.gmra.mxu0 %v402
        %v535 = vpop.f32.mrf.mxu0
        %v536 = vadd.f32 0.0, %v535
        %v537 = vpop.f32.mrf.mxu0
        %v538 = vpop.f32.mrf.mxu0
        %v539 = vadd.f32 0.0, %v538
        %v540 = vpop.f32.mrf.mxu0
        %541 = vmatprep.mubr.bf16.mxu0 0
        %542 = vmatmul.mubr.bf16.gmra.mxu0 %v405
        %v543 = vpop.f32.mrf.mxu0
        %v544 = vadd.f32 0.0, %v543
        %v545 = vpop.f32.mrf.mxu0
        %v546 = vpop.f32.mrf.mxu0
        %v547 = vadd.f32 0.0, %v546
        %v548 = vpop.f32.mrf.mxu0
        %549 = vmatprep.mubr.bf16.mxu0 0
        %550 = vmatmul.mubr.bf16.gmra.mxu0 %v408
        %v551 = vpop.f32.mrf.mxu0
        %v552 = vadd.f32 0.0, %v551
        %v553 = vpop.f32.mrf.mxu0
        %v554 = vpop.f32.mrf.mxu0
        %v555 = vadd.f32 0.0, %v554
        %v556 = vpop.f32.mrf.mxu0
        %557 = vmatprep.mubr.bf16.mxu0 0
        %558 = vmatmul.mubr.bf16.gmra.mxu0 %v411
        %v559 = vpop.f32.mrf.mxu0
        %v560 = vadd.f32 0.0, %v559
        %v561 = vpop.f32.mrf.mxu0
        %v562 = vpop.f32.mrf.mxu0
        %v563 = vadd.f32 0.0, %v562
        %v564 = vpop.f32.mrf.mxu0
        %565 = vmatprep.mubr.bf16.mxu0 0
        %566 = vmatmul.mubr.bf16.gmra.mxu0 %v414
        %v567 = vpop.f32.mrf.mxu0
        %v568 = vadd.f32 0.0, %v567
        %v569 = vpop.f32.mrf.mxu0
        %v570 = vpop.f32.mrf.mxu0
        %v571 = vadd.f32 0.0, %v570
        %v572 = vpop.f32.mrf.mxu0
        %573 = vmatprep.mubr.bf16.mxu0 0
        %574 = vmatmul.mubr.bf16.gmra.mxu0 %v417
        %v575 = vpop.f32.mrf.mxu0
        %v576 = vadd.f32 0.0, %v575
        %v577 = vpop.f32.mrf.mxu0
        %v578 = vpop.f32.mrf.mxu0
        %v579 = vadd.f32 0.0, %v578
        %v580 = vpop.f32.mrf.mxu0
        %581 = vmatprep.mubr.bf16.mxu0 0
        %582 = vmatmul.mubr.bf16.gmra.mxu0 %v420
        %v583 = vpop.f32.mrf.mxu0
        %v584 = vadd.f32 0.0, %v583
        %v585 = vpop.f32.mrf.mxu0
        %v586 = vpop.f32.mrf.mxu0
        %v587 = vadd.f32 0.0, %v586
        %v588 = vpop.f32.mrf.mxu0
        %589 = vdwg.mxu0
        %v590 = vadd.f32 %v256, %v464
        %v591 = vadd.f32 %v257, %v467
        %v592 = vadd.f32 %v258, %v472
        %v593 = vadd.f32 %v259, %v475
        %v594 = vadd.f32 %v260, %v480
        %v595 = vadd.f32 %v261, %v483
        %v596 = vadd.f32 %v262, %v488
        %v597 = vadd.f32 %v263, %v491
        %v598 = vadd.f32 %v264, %v496
        %v599 = vadd.f32 %v265, %v499
        %v600 = vadd.f32 %v266, %v504
        %v601 = vadd.f32 %v267, %v507
        %v602 = vadd.f32 %v268, %v512
        %v603 = vadd.f32 %v269, %v515
        %v604 = vadd.f32 %v270, %v520
        %v605 = vadd.f32 %v271, %v523
        %v606 = vadd.f32 %v272, %v528
        %v607 = vadd.f32 %v273, %v531
        %v608 = vadd.f32 %v274, %v536
        %v609 = vadd.f32 %v275, %v539
        %v610 = vadd.f32 %v276, %v544
        %v611 = vadd.f32 %v277, %v547
        %v612 = vadd.f32 %v278, %v552
        %v613 = vadd.f32 %v279, %v555
        %v614 = vadd.f32 %v280, %v560
        %v615 = vadd.f32 %v281, %v563
        %v616 = vadd.f32 %v282, %v568
        %v617 = vadd.f32 %v283, %v571
        %v618 = vadd.f32 %v284, %v576
        %v619 = vadd.f32 %v285, %v579
        %v620 = vadd.f32 %v286, %v584
        %v621 = vadd.f32 %v287, %v587
        %622 = vst [vmem:[#allocation2] sm:$0xff] %v590
        %623 = vst [vmem:[#allocation2 + $0x8] sm:$0xff] %v591
        %624 = vst [vmem:[#allocation2 + $0x10] sm:$0xff] %v592
        %625 = vst [vmem:[#allocation2 + $0x18] sm:$0xff] %v593
        %626 = vst [vmem:[#allocation2 + $0x20] sm:$0xff] %v594
        %627 = vst [vmem:[#allocation2 + $0x28] sm:$0xff] %v595
        %628 = vst [vmem:[#allocation2 + $0x30] sm:$0xff] %v596
        %629 = vst [vmem:[#allocation2 + $0x38] sm:$0xff] %v597
        %630 = vst [vmem:[#allocation2 + $0x40] sm:$0xff] %v598
        %631 = vst [vmem:[#allocation2 + $0x48] sm:$0xff] %v599
        %632 = vst [vmem:[#allocation2 + $0x50] sm:$0xff] %v600
        %633 = vst [vmem:[#allocation2 + $0x58] sm:$0xff] %v601
        %634 = vst [vmem:[#allocation2 + $0x60] sm:$0xff] %v602
        %635 = vst [vmem:[#allocation2 + $0x68] sm:$0xff] %v603
        %636 = vst [vmem:[#allocation2 + $0x70] sm:$0xff] %v604
        %637 = vst [vmem:[#allocation2 + $0x78] sm:$0xff] %v605
        %638 = vst [vmem:[#allocation2 + $0x80] sm:$0xff] %v606
        %639 = vst [vmem:[#allocation2 + $0x88] sm:$0xff] %v607
        %640 = vst [vmem:[#allocation2 + $0x90] sm:$0xff] %v608
        %641 = vst [vmem:[#allocation2 + $0x98] sm:$0xff] %v609
        %642 = vst [vmem:[#allocation2 + $0xa0] sm:$0xff] %v610
        %643 = vst [vmem:[#allocation2 + $0xa8] sm:$0xff] %v611
        %644 = vst [vmem:[#allocation2 + $0xb0] sm:$0xff] %v612
        %645 = vst [vmem:[#allocation2 + $0xb8] sm:$0xff] %v613
        %646 = vst [vmem:[#allocation2 + $0xc0] sm:$0xff] %v614
        %647 = vst [vmem:[#allocation2 + $0xc8] sm:$0xff] %v615
        %648 = vst [vmem:[#allocation2 + $0xd0] sm:$0xff] %v616
        %649 = vst [vmem:[#allocation2 + $0xd8] sm:$0xff] %v617
        %650 = vst [vmem:[#allocation2 + $0xe0] sm:$0xff] %v618
        %651 = vst [vmem:[#allocation2 + $0xe8] sm:$0xff] %v619
        %652 = vst [vmem:[#allocation2 + $0xf0] sm:$0xff] %v620
        %653 = vst [vmem:[#allocation2 + $0xf8] sm:$0xff] %v621
        %v654 = vld [vmem:[#allocation2] sm:$0xff]
        %v655 = vld [vmem:[#allocation2 + $0x8] sm:$0xff]
        %v656 = vld [vmem:[#allocation2 + $0x10] sm:$0xff]
        %v657 = vld [vmem:[#allocation2 + $0x18] sm:$0xff]
        %v658 = vld [vmem:[#allocation2 + $0x20] sm:$0xff]
        %v659 = vld [vmem:[#allocation2 + $0x28] sm:$0xff]
        %v660 = vld [vmem:[#allocation2 + $0x30] sm:$0xff]
        %v661 = vld [vmem:[#allocation2 + $0x38] sm:$0xff]
        %v662 = vld [vmem:[#allocation2 + $0x40] sm:$0xff]
        %v663 = vld [vmem:[#allocation2 + $0x48] sm:$0xff]
        %v664 = vld [vmem:[#allocation2 + $0x50] sm:$0xff]
        %v665 = vld [vmem:[#allocation2 + $0x58] sm:$0xff]
        %v666 = vld [vmem:[#allocation2 + $0x60] sm:$0xff]
        %v667 = vld [vmem:[#allocation2 + $0x68] sm:$0xff]
        %v668 = vld [vmem:[#allocation2 + $0x70] sm:$0xff]
        %v669 = vld [vmem:[#allocation2 + $0x78] sm:$0xff]
        %v670 = vld [vmem:[#allocation2 + $0x80] sm:$0xff]
        %v671 = vld [vmem:[#allocation2 + $0x88] sm:$0xff]
        %v672 = vld [vmem:[#allocation2 + $0x90] sm:$0xff]
        %v673 = vld [vmem:[#allocation2 + $0x98] sm:$0xff]
        %v674 = vld [vmem:[#allocation2 + $0xa0] sm:$0xff]
        %v675 = vld [vmem:[#allocation2 + $0xa8] sm:$0xff]
        %v676 = vld [vmem:[#allocation2 + $0xb0] sm:$0xff]
        %v677 = vld [vmem:[#allocation2 + $0xb8] sm:$0xff]
        %v678 = vld [vmem:[#allocation2 + $0xc0] sm:$0xff]
        %v679 = vld [vmem:[#allocation2 + $0xc8] sm:$0xff]
        %v680 = vld [vmem:[#allocation2 + $0xd0] sm:$0xff]
        %v681 = vld [vmem:[#allocation2 + $0xd8] sm:$0xff]
        %v682 = vld [vmem:[#allocation2 + $0xe0] sm:$0xff]
        %v683 = vld [vmem:[#allocation2 + $0xe8] sm:$0xff]
        %v684 = vld [vmem:[#allocation2 + $0xf0] sm:$0xff]
        %v685 = vld [vmem:[#allocation2 + $0xf8] sm:$0xff]
        %v686 = vld [vmem:[%s2] sm:$0x1]
        %v688 = vlaneseq
        %v689 = vshrl.u32 %v688, 7
        %v690 = vsub.s32 0, %v689
        %v691 = vrot.slane %v686, %v690
        %v693 = vadd.f32 %v654, %v691
        %v694 = vadd.f32 %v655, %v691
        %v695 = vadd.f32 %v656, %v691
        %v696 = vadd.f32 %v657, %v691
        %v697 = vadd.f32 %v658, %v691
        %v698 = vadd.f32 %v659, %v691
        %v699 = vadd.f32 %v660, %v691
        %v700 = vadd.f32 %v661, %v691
        %v701 = vadd.f32 %v662, %v691
        %v702 = vadd.f32 %v663, %v691
        %v703 = vadd.f32 %v664, %v691
        %v704 = vadd.f32 %v665, %v691
        %v705 = vadd.f32 %v666, %v691
        %v706 = vadd.f32 %v667, %v691
        %v707 = vadd.f32 %v668, %v691
        %v708 = vadd.f32 %v669, %v691
        %v709 = vadd.f32 %v670, %v691
        %v710 = vadd.f32 %v671, %v691
        %v711 = vadd.f32 %v672, %v691
        %v712 = vadd.f32 %v673, %v691
        %v713 = vadd.f32 %v674, %v691
        %v714 = vadd.f32 %v675, %v691
        %v715 = vadd.f32 %v676, %v691
        %v716 = vadd.f32 %v677, %v691
        %v717 = vadd.f32 %v678, %v691
        %v718 = vadd.f32 %v679, %v691
        %v719 = vadd.f32 %v680, %v691
        %v720 = vadd.f32 %v681, %v691
        %v721 = vadd.f32 %v682, %v691
        %v722 = vadd.f32 %v683, %v691
        %v723 = vadd.f32 %v684, %v691
        %v724 = vadd.f32 %v685, %v691
        %vm725 = vcmp.ge.f32.partialorder %v693, 0.0
        %vm726 = vcmp.ge.f32.partialorder %v694, 0.0
        %vm727 = vcmp.ge.f32.partialorder %v695, 0.0
        %vm728 = vcmp.ge.f32.partialorder %v696, 0.0
        %vm729 = vcmp.ge.f32.partialorder %v697, 0.0
        %vm730 = vcmp.ge.f32.partialorder %v698, 0.0
        %vm731 = vcmp.ge.f32.partialorder %v699, 0.0
        %vm732 = vcmp.ge.f32.partialorder %v700, 0.0
        %vm733 = vcmp.ge.f32.partialorder %v701, 0.0
        %vm734 = vcmp.ge.f32.partialorder %v702, 0.0
        %vm735 = vcmp.ge.f32.partialorder %v703, 0.0
        %vm736 = vcmp.ge.f32.partialorder %v704, 0.0
        %vm737 = vcmp.ge.f32.partialorder %v705, 0.0
        %vm738 = vcmp.ge.f32.partialorder %v706, 0.0
        %vm739 = vcmp.ge.f32.partialorder %v707, 0.0
        %vm740 = vcmp.ge.f32.partialorder %v708, 0.0
        %vm741 = vcmp.ge.f32.partialorder %v709, 0.0
        %vm742 = vcmp.ge.f32.partialorder %v710, 0.0
        %vm743 = vcmp.ge.f32.partialorder %v711, 0.0
        %vm744 = vcmp.ge.f32.partialorder %v712, 0.0
        %vm745 = vcmp.ge.f32.partialorder %v713, 0.0
        %vm746 = vcmp.ge.f32.partialorder %v714, 0.0
        %vm747 = vcmp.ge.f32.partialorder %v715, 0.0
        %vm748 = vcmp.ge.f32.partialorder %v716, 0.0
        %vm749 = vcmp.ge.f32.partialorder %v717, 0.0
        %vm750 = vcmp.ge.f32.partialorder %v718, 0.0
        %vm751 = vcmp.ge.f32.partialorder %v719, 0.0
        %vm752 = vcmp.ge.f32.partialorder %v720, 0.0
        %vm753 = vcmp.ge.f32.partialorder %v721, 0.0
        %vm754 = vcmp.ge.f32.partialorder %v722, 0.0
        %vm755 = vcmp.ge.f32.partialorder %v723, 0.0
        %vm756 = vcmp.ge.f32.partialorder %v724, 0.0
        %v757 = vmul.f32 %v693, 0.1
        %v758 = vmul.f32 %v694, 0.1
        %v759 = vmul.f32 %v695, 0.1
        %v760 = vmul.f32 %v696, 0.1
        %v761 = vmul.f32 %v697, 0.1
        %v762 = vmul.f32 %v698, 0.1
        %v763 = vmul.f32 %v699, 0.1
        %v764 = vmul.f32 %v700, 0.1
        %v765 = vmul.f32 %v701, 0.1
        %v766 = vmul.f32 %v702, 0.1
        %v767 = vmul.f32 %v703, 0.1
        %v768 = vmul.f32 %v704, 0.1
        %v769 = vmul.f32 %v705, 0.1
        %v770 = vmul.f32 %v706, 0.1
        %v771 = vmul.f32 %v707, 0.1
        %v772 = vmul.f32 %v708, 0.1
        %v773 = vmul.f32 %v709, 0.1
        %v774 = vmul.f32 %v710, 0.1
        %v775 = vmul.f32 %v711, 0.1
        %v776 = vmul.f32 %v712, 0.1
        %v777 = vmul.f32 %v713, 0.1
        %v778 = vmul.f32 %v714, 0.1
        %v779 = vmul.f32 %v715, 0.1
        %v780 = vmul.f32 %v716, 0.1
        %v781 = vmul.f32 %v717, 0.1
        %v782 = vmul.f32 %v718, 0.1
        %v783 = vmul.f32 %v719, 0.1
        %v784 = vmul.f32 %v720, 0.1
        %v785 = vmul.f32 %v721, 0.1
        %v786 = vmul.f32 %v722, 0.1
        %v787 = vmul.f32 %v723, 0.1
        %v788 = vmul.f32 %v724, 0.1
        %v789 = vsel %vm725, %v693, %v757
        %v790 = vsel %vm726, %v694, %v758
        %v791 = vsel %vm727, %v695, %v759
        %v792 = vsel %vm728, %v696, %v760
        %v793 = vsel %vm729, %v697, %v761
        %v794 = vsel %vm730, %v698, %v762
        %v795 = vsel %vm731, %v699, %v763
        %v796 = vsel %vm732, %v700, %v764
        %v797 = vsel %vm733, %v701, %v765
        %v798 = vsel %vm734, %v702, %v766
        %v799 = vsel %vm735, %v703, %v767
        %v800 = vsel %vm736, %v704, %v768
        %v801 = vsel %vm737, %v705, %v769
        %v802 = vsel %vm738, %v706, %v770
        %v803 = vsel %vm739, %v707, %v771
        %v804 = vsel %vm740, %v708, %v772
        %v805 = vsel %vm741, %v709, %v773
        %v806 = vsel %vm742, %v710, %v774
        %v807 = vsel %vm743, %v711, %v775
        %v808 = vsel %vm744, %v712, %v776
        %v809 = vsel %vm745, %v713, %v777
        %v810 = vsel %vm746, %v714, %v778
        %v811 = vsel %vm747, %v715, %v779
        %v812 = vsel %vm748, %v716, %v780
        %v813 = vsel %vm749, %v717, %v781
        %v814 = vsel %vm750, %v718, %v782
        %v815 = vsel %vm751, %v719, %v783
        %v816 = vsel %vm752, %v720, %v784
        %v817 = vsel %vm753, %v721, %v785
        %v818 = vsel %vm754, %v722, %v786
        %v819 = vsel %vm755, %v723, %v787
        %v820 = vsel %vm756, %v724, %v788
        %v821 = vpack.c.bf16 %v790, %v789
        %v822 = vpack.c.bf16 %v792, %v791
        %v823 = vpack.c.bf16 %v794, %v793
        %v824 = vpack.c.bf16 %v796, %v795
        %v825 = vpack.c.bf16 %v798, %v797
        %v826 = vpack.c.bf16 %v800, %v799
        %v827 = vpack.c.bf16 %v802, %v801
        %v828 = vpack.c.bf16 %v804, %v803
        %v829 = vpack.c.bf16 %v806, %v805
        %v830 = vpack.c.bf16 %v808, %v807
        %v831 = vpack.c.bf16 %v810, %v809
        %v832 = vpack.c.bf16 %v812, %v811
        %v833 = vpack.c.bf16 %v814, %v813
        %v834 = vpack.c.bf16 %v816, %v815
        %v835 = vpack.c.bf16 %v818, %v817
        %v836 = vpack.c.bf16 %v820, %v819
        %v853 = vunpack.c.l.b16 %v821
        %v854 = vunpack.c.h.b16 %v821
        %v855 = vunpack.c.l.b16 %v822
        %v856 = vunpack.c.h.b16 %v822
        %v857 = vunpack.c.l.b16 %v823
        %v858 = vunpack.c.h.b16 %v823
        %v859 = vunpack.c.l.b16 %v824
        %v860 = vunpack.c.h.b16 %v824
        %v861 = vunpack.c.l.b16 %v825
        %v862 = vunpack.c.h.b16 %v825
        %v863 = vunpack.c.l.b16 %v826
        %v864 = vunpack.c.h.b16 %v826
        %v865 = vunpack.c.l.b16 %v827
        %v866 = vunpack.c.h.b16 %v827
        %v867 = vunpack.c.l.b16 %v828
        %v868 = vunpack.c.h.b16 %v828
        %v869 = vunpack.c.l.b16 %v829
        %v870 = vunpack.c.h.b16 %v829
        %v871 = vunpack.c.l.b16 %v830
        %v872 = vunpack.c.h.b16 %v830
        %v873 = vunpack.c.l.b16 %v831
        %v874 = vunpack.c.h.b16 %v831
        %v875 = vunpack.c.l.b16 %v832
        %v876 = vunpack.c.h.b16 %v832
        %v877 = vunpack.c.l.b16 %v833
        %v878 = vunpack.c.h.b16 %v833
        %v879 = vunpack.c.l.b16 %v834
        %v880 = vunpack.c.h.b16 %v834
        %v881 = vunpack.c.l.b16 %v835
        %v882 = vunpack.c.h.b16 %v835
        %v883 = vunpack.c.l.b16 %v836
        %v884 = vunpack.c.h.b16 %v836
        %v885 = vpack.c.b16 %v853, %v853
        %v886 = vpack.c.b16 %v854, %v854
        %v887 = vpack.c.b16 %v855, %v855
        %v888 = vpack.c.b16 %v856, %v856
        %v889 = vpack.c.b16 %v857, %v857
        %v890 = vpack.c.b16 %v858, %v858
        %v891 = vpack.c.b16 %v859, %v859
        %v892 = vpack.c.b16 %v860, %v860
        %v893 = vpack.c.b16 %v861, %v861
        %v894 = vpack.c.b16 %v862, %v862
        %v895 = vpack.c.b16 %v863, %v863
        %v896 = vpack.c.b16 %v864, %v864
        %v897 = vpack.c.b16 %v865, %v865
        %v898 = vpack.c.b16 %v866, %v866
        %v899 = vpack.c.b16 %v867, %v867
        %v900 = vpack.c.b16 %v868, %v868
        %v901 = vpack.c.b16 %v869, %v869
        %v902 = vpack.c.b16 %v870, %v870
        %v903 = vpack.c.b16 %v871, %v871
        %v904 = vpack.c.b16 %v872, %v872
        %v905 = vpack.c.b16 %v873, %v873
        %v906 = vpack.c.b16 %v874, %v874
        %v907 = vpack.c.b16 %v875, %v875
        %v908 = vpack.c.b16 %v876, %v876
        %v909 = vpack.c.b16 %v877, %v877
        %v910 = vpack.c.b16 %v878, %v878
        %v911 = vpack.c.b16 %v879, %v879
        %v912 = vpack.c.b16 %v880, %v880
        %v913 = vpack.c.b16 %v881, %v881
        %v914 = vpack.c.b16 %v882, %v882
        %v915 = vpack.c.b16 %v883, %v883
        %v916 = vpack.c.b16 %v884, %v884
        %949 = vst [vmem:[%s177] sm:$0xf] %v885
        %950 = vst [vmem:[%s177 + $0x4] sm:$0xf] %v886
        %951 = vst [vmem:[%s177 + $0x8] sm:$0xf] %v887
        %952 = vst [vmem:[%s177 + $0xc] sm:$0xf] %v888
        %953 = vst [vmem:[%s177 + $0x10] sm:$0xf] %v889
        %954 = vst [vmem:[%s177 + $0x14] sm:$0xf] %v890
        %955 = vst [vmem:[%s177 + $0x18] sm:$0xf] %v891
        %956 = vst [vmem:[%s177 + $0x1c] sm:$0xf] %v892
        %957 = vst [vmem:[%s177 + $0x20] sm:$0xf] %v893
        %958 = vst [vmem:[%s177 + $0x24] sm:$0xf] %v894
        %959 = vst [vmem:[%s177 + $0x28] sm:$0xf] %v895
        %960 = vst [vmem:[%s177 + $0x2c] sm:$0xf] %v896
        %961 = vst [vmem:[%s177 + $0x30] sm:$0xf] %v897
        %962 = vst [vmem:[%s177 + $0x34] sm:$0xf] %v898
        %963 = vst [vmem:[%s177 + $0x38] sm:$0xf] %v899
        %964 = vst [vmem:[%s177 + $0x3c] sm:$0xf] %v900
        %965 = vst [vmem:[%s177 + $0x40] sm:$0xf] %v901
        %966 = vst [vmem:[%s177 + $0x44] sm:$0xf] %v902
        %967 = vst [vmem:[%s177 + $0x48] sm:$0xf] %v903
        %968 = vst [vmem:[%s177 + $0x4c] sm:$0xf] %v904
        %969 = vst [vmem:[%s177 + $0x50] sm:$0xf] %v905
        %970 = vst [vmem:[%s177 + $0x54] sm:$0xf] %v906
        %971 = vst [vmem:[%s177 + $0x58] sm:$0xf] %v907
        %972 = vst [vmem:[%s177 + $0x5c] sm:$0xf] %v908
        %973 = vst [vmem:[%s177 + $0x60] sm:$0xf] %v909
        %974 = vst [vmem:[%s177 + $0x64] sm:$0xf] %v910
        %975 = vst [vmem:[%s177 + $0x68] sm:$0xf] %v911
        %976 = vst [vmem:[%s177 + $0x6c] sm:$0xf] %v912
        %977 = vst [vmem:[%s177 + $0x70] sm:$0xf] %v913
        %978 = vst [vmem:[%s177 + $0x74] sm:$0xf] %v914
        %979 = vst [vmem:[%s177 + $0x78] sm:$0xf] %v915
        %980 = vst [vmem:[%s177 + $0x7c] sm:$0xf] %v916
        %s981 = sand.u32 %s107, 1
        %s982 = scalar_lea.sflag [#allocation4], %s981
        %s983 = sand.u32 %s107, 1
        %s984 = smul.addr %s983, 128
        %s985 = scalar_lea.vmem [#allocation3], %s984
        // Predicated region
        $region33: #{tpu_custom_call.1} parent=31 // pred_check
          %p986 = pneg %p117
        $region34: #{tpu_custom_call.1} parent=31 // pred_check_branch
          %988 = sbr.rel (%p986) target = $region36
        $region35: #{tpu_custom_call.1} parent=31 // pred_region
          %s989 = smul.u32 32, %s22
          %s991 = ssub.s32 2048, 2048
          %992 = vsyncadd %s982, %s991
          %s993 = smul.addr %s21, 64
          %s994 = sadd.s32 %s989, %s993
          %s995 = smul.addr %s994, 64
          %s996 = scalar_lea.hbm %s3, %s995
          %s997 = sshll.u32 %s985, 4
          %s998 = int_to_ptr.vmem [resolvable:$true] %s997
          %1003 = dma.vmem_to_hbm [thread:$0]  %s998, 2048, %s996, %s982, 64, 64, 4
        $region36: #{tpu_custom_call.1} parent=31 // pred_fallthru
          _
      $region32: #{tpu_custom_call.1} parent=5 // pred_fallthru
        _
      %p1004 = scmp.le.s32.totalorder 2, %s12
      // Predicated region
      $region37: #{tpu_custom_call.1} parent=5 // pred_check
        %p1005 = pneg %p1004
      $region38: #{tpu_custom_call.1} parent=5 // pred_check_branch
        %1007 = sbr.rel (%p1005) target = $region40
      $region39: #{tpu_custom_call.1} parent=5 // pred_region
        %s1008 = ssub.s32 %s12, 2
        // Predicated region
        $region41: #{tpu_custom_call.1} parent=39 // pred_check
          %p1009 = pneg %p123
        $region42: #{tpu_custom_call.1} parent=39 // pred_check_branch
          %1011 = sbr.rel (%p1009) target = $region44
        $region43: #{tpu_custom_call.1} parent=39 // pred_region
          %s1012 = sand.u32 %s108, 1
          %s1013 = scalar_lea.sflag [#allocation4], %s1012
          %s1014 = sand.u32 %s108, 1
          %s1015 = smul.addr %s1014, 128
          %s1016 = scalar_lea.vmem [#allocation3], %s1015
          %1017 = dma.done %s1013, 2048
        $region44: #{tpu_custom_call.1} parent=39 // pred_fallthru
          _
      $region40: #{tpu_custom_call.1} parent=5 // pred_fallthru
        _
    $region6: #{tpu_custom_call.1} parent=1 // loop_footer
      %s16 = sadd.s32 1, %s12
    $region7: #{tpu_custom_call.1} parent=1 // loop_footer_branch
      %11 = sbr.rel target = $region3
    $region8: #{tpu_custom_call.1} parent=1 // loop_exit
      _
    %1018 = vsyncpa [#allocation4], 1
    %s1019 = scalar_lea.sflag [#allocation4], 1
    %1020 = vsyncpa %s1019, 1

</llo_original>
